<compile_context>
chip_gen: v7x
topology: tpu7x:2x2x1
jax: 0.10.0
libtpu: 0.0.40
codegen_flags: <defaults>
</compile_context>

<pallas_src>
import functools
import math

import jax
import jax.numpy as jnp
from jax.experimental import pallas as pl
from jax.experimental.pallas import tpu as pltpu

NEG_INF = -1e9  # additive mask sentinel (finite; safe even when masks add)


# ---------------------------------------------------------------------------
# Fused kernel: one (batch b, layer l) grid step of the whole decoder stack.
# ---------------------------------------------------------------------------
def fused_decoder_kernel(x_ref, pos_ref, mask_ref,
                         ln1w_ref, ln1b_ref, wqkv_ref, bqkv_ref,
                         wo_ref, bo_ref, ln2w_ref, ln2b_ref,
                         w1_ref, b1_ref, w2_ref, b2_ref,
                         o_ref, x_state, *, nhead):
    l = pl.program_id(1)
    n_layers = pl.num_programs(1)

    S, D = x_state.shape
    hd = D // nhead

    # ---- first layer only: load x for this batch element + positional enc.
    @pl.when(l == 0)
    def _init():
        x_state[...] = x_ref[0] + pos_ref[0]

    x = x_state[...]                                          # (S, D) f32

    def layernorm(v, w, b):
        mu = jnp.mean(v, axis=-1, keepdims=True)
        var = jnp.mean((v - mu) ** 2, axis=-1, keepdims=True)
        return (v - mu) * jax.lax.rsqrt(var + 1e-5) * w + b

    # ---- LayerNorm 1 (f32 VPU math) ----
    ln1 = layernorm(x, ln1w_ref[0], ln1b_ref[0])

    # ---- fused QKV projection: one bf16 MXU matmul, f32 accumulation.
    #      1/sqrt(hd) is already folded into the q-slice of wqkv/bqkv.
    qkv = jnp.dot(ln1.astype(jnp.bfloat16), wqkv_ref[0],
                  preferred_element_type=jnp.float32) + bqkv_ref[0]  # (S, 3D)
    q = qkv[:, :D]
    k = qkv[:, D:2 * D]
    v = qkv[:, 2 * D:]

    # ---- batched multi-head attention (no per-head loop / concatenate) ----
    qh = pltpu.einshape("mhd->hmd", q.reshape(S, nhead, hd))   # (h, S, hd)
    kh = pltpu.einshape("mhd->hmd", k.reshape(S, nhead, hd))
    vh = pltpu.einshape("mhd->hmd", v.reshape(S, nhead, hd))

    mask = mask_ref[0]                                         # (S, S) additive
    s = jnp.einsum("hqd,hkd->hqk", qh, kh,
                   preferred_element_type=jnp.float32) + mask[None]
    m = jnp.max(s, axis=-1, keepdims=True)
    p = jnp.exp(s - m)
    p = p * pl.reciprocal(jnp.sum(p, axis=-1, keepdims=True), approx=True)
    oh = jnp.einsum("hqk,hkd->hqd", p, vh,
                    preferred_element_type=jnp.float32)        # (h, S, hd)
    attn = pltpu.einshape("hmd->mhd", oh).reshape(S, D)

    attn = jnp.dot(attn.astype(jnp.bfloat16), wo_ref[0],
                   preferred_element_type=jnp.float32) + bo_ref[0]

    # ---- residual 1, LayerNorm 2, FFN, residual 2 (spec semantics) ----
    x1 = ln1 + attn
    ln2 = layernorm(x1, ln2w_ref[0], ln2b_ref[0])
    h1 = jnp.maximum(
        jnp.dot(ln2.astype(jnp.bfloat16), w1_ref[0],
                preferred_element_type=jnp.float32) + b1_ref[0], 0.0)
    h2 = jnp.dot(h1.astype(jnp.bfloat16), w2_ref[0],
                 preferred_element_type=jnp.float32) + b2_ref[0]
    y = ln2 + h2

    # keep the running activation resident in VMEM across the layer axis
    x_state[...] = y

    # ---- last layer: single writeback of the whole sequence ----
    @pl.when(l == n_layers - 1)
    def _finalize():
        o_ref[0] = y.astype(o_ref.dtype)


# ---------------------------------------------------------------------------
# One-time parameter preparation (transpose / fuse QKV / fold scale / stack).
# ---------------------------------------------------------------------------
def prepare_decoder_params(layers, nhead, mxu_dtype=jnp.bfloat16):
    D = layers[0]["wq"].shape[0]
    hd = D // nhead
    scale = 1.0 / math.sqrt(hd)

    def stack(fn, dtype=jnp.float32):
        return jnp.stack([fn(p) for p in layers], axis=0).astype(dtype)

    return dict(
        ln1w=stack(lambda p: p["ln1w"]),
        ln1b=stack(lambda p: p["ln1b"]),
        # fused QKV weight (D, 3D): 1/sqrt(hd) folded into the q columns
        wqkv=stack(lambda p: jnp.concatenate(
            [p["wq"].T * scale, p["wk"].T, p["wv"].T], axis=1), mxu_dtype),
        bqkv=stack(lambda p: jnp.concatenate(
            [p["bq"] * scale, p["bk"], p["bv"]], axis=1)),
        wo=stack(lambda p: p["wo"].T, mxu_dtype),
        bo=stack(lambda p: p["bo"]),
        ln2w=stack(lambda p: p["ln2w"]),
        ln2b=stack(lambda p: p["ln2b"]),
        w1=stack(lambda p: p["w1"].T, mxu_dtype),
        b1=stack(lambda p: p["b1"]),
        w2=stack(lambda p: p["w2"].T, mxu_dtype),
        b2=stack(lambda p: p["b2"]),
    )


# ---------------------------------------------------------------------------
# Wrapper: single fused pallas_call over (batch, layer).
# ---------------------------------------------------------------------------
def transformer_decoder(x, pos, padding_mask, attn_mask, params, nhead):
    B, S, D = x.shape
    L = params["wqkv"].shape[0]
    DFF = params["w1"].shape[-1]

    pos_s = pos[:, :S].astype(jnp.float32)                        # (1, S, D)
    # One combined additive mask per batch element (causal + key padding).
    pad_add = jnp.where(padding_mask, NEG_INF, 0.0).astype(jnp.float32)
    comb_mask = attn_mask.astype(jnp.float32)[None] + pad_add[:, None, :]  # (B,S,S)

    def layer_spec(shape):
        nd = len(shape)
        return pl.BlockSpec((1,) + shape, lambda b, l, _nd=nd: (l,) + (0,) * _nd)

    in_specs = [
        pl.BlockSpec((1, S, D), lambda b, l: (b, 0, 0)),   # x
        pl.BlockSpec((1, S, D), lambda b, l: (0, 0, 0)),   # positional enc
        pl.BlockSpec((1, S, S), lambda b, l: (b, 0, 0)),   # combined additive mask
        layer_spec((1, D)),        # ln1w
        layer_spec((1, D)),        # ln1b
        layer_spec((D, 3 * D)),    # wqkv (bf16)
        layer_spec((1, 3 * D)),    # bqkv
        layer_spec((D, D)),        # wo (bf16)
        layer_spec((1, D)),        # bo
        layer_spec((1, D)),        # ln2w
        layer_spec((1, D)),        # ln2b
        layer_spec((D, DFF)),      # w1 (bf16)
        layer_spec((1, DFF)),      # b1
        layer_spec((DFF, D)),      # w2 (bf16)
        layer_spec((1, D)),        # b2
    ]

    return pl.pallas_call(
        functools.partial(fused_decoder_kernel, nhead=nhead),
        out_shape=jax.ShapeDtypeStruct((B, S, D), jnp.float32),
        grid_spec=pltpu.PrefetchScalarGridSpec(
            num_scalar_prefetch=0,
            grid=(B, L),                     # batch parallel, layers sequential
            in_specs=in_specs,
            out_specs=pl.BlockSpec((1, S, D), lambda b, l: (b, 0, 0)),
            scratch_shapes=[pltpu.VMEM((S, D), jnp.float32)],
        ),
        compiler_params=pltpu.CompilerParams(
            dimension_semantics=("parallel", "arbitrary")),
    )(x, pos_s, comb_mask,
      params["ln1w"], params["ln1b"], params["wqkv"], params["bqkv"],
      params["wo"], params["bo"], params["ln2w"], params["ln2b"],
      params["w1"], params["b1"], params["w2"], params["b2"])


# ---------------------------------------------------------------------------
# Pure-JAX f32 reference (correctness check only; spec-module semantics)
# ---------------------------------------------------------------------------
def reference_forward(x, pos, padding_mask, attn_mask, layers, nhead):
    hp = jax.lax.Precision.HIGHEST
    B, S, D = x.shape
    hd = D // nhead
    x = x + pos[:, :S]
    pad_add = jnp.where(padding_mask, NEG_INF, 0.0).astype(jnp.float32)[:, None, :]

    def ln(v, w, b):
        mu = v.mean(-1, keepdims=True)
        var = ((v - mu) ** 2).mean(-1, keepdims=True)
        return (v - mu) * jax.lax.rsqrt(var + 1e-5) * w + b

    for p in layers:
        x1 = ln(x, p["ln1w"], p["ln1b"])
        q = jnp.einsum("bsd,ed->bse", x1, p["wq"], precision=hp) + p["bq"]
        k = jnp.einsum("bsd,ed->bse", x1, p["wk"], precision=hp) + p["bk"]
        v = jnp.einsum("bsd,ed->bse", x1, p["wv"], precision=hp) + p["bv"]
        q = q.reshape(B, S, nhead, hd).transpose(0, 2, 1, 3) / math.sqrt(hd)
        k = k.reshape(B, S, nhead, hd).transpose(0, 2, 1, 3)
        v = v.reshape(B, S, nhead, hd).transpose(0, 2, 1, 3)
        s = (jnp.einsum("bhqd,bhkd->bhqk", q, k, precision=hp)
             + attn_mask[None, None] + pad_add[:, None])
        a = jax.nn.softmax(s, axis=-1)
        o = jnp.einsum("bhqk,bhkd->bhqd", a, v, precision=hp)
        o = o.transpose(0, 2, 1, 3).reshape(B, S, D)
        o = jnp.einsum("bsd,ed->bse", o, p["wo"], precision=hp) + p["bo"]
        x2 = x1 + o
        x3 = ln(x2, p["ln2w"], p["ln2b"])
        h = jax.nn.relu(jnp.einsum("bsd,fd->bsf", x3, p["w1"], precision=hp) + p["b1"])
        f = jnp.einsum("bsf,df->bsd", h, p["w2"], precision=hp) + p["b2"]
        x = x3 + f
    return x


# ---------------------------------------------------------------------------
if __name__ == "__main__":
    B, S, MAX_LEN, D, NHEAD, NLAYERS = 2, 8, 16, 32, 4, 2
    DFF = 4 * D

    key = jax.random.PRNGKey(0)
    k_x, k_pos, k_w = jax.random.split(key, 3)
    x = jax.random.normal(k_x, (B, S, D), jnp.float32)
    pos = jax.random.normal(k_pos, (1, MAX_LEN, D), jnp.float32)

    # key_padding_mask: True = ignore (last two positions of batch element 1)
    padding_mask = jnp.zeros((B, S), bool).at[1, S - 2:].set(True)
    # causal additive float attn_mask
    attn_mask = jnp.where(jnp.arange(S)[None, :] > jnp.arange(S)[:, None],
                          NEG_INF, 0.0).astype(jnp.float32)

    def nrm(k, shape, scale=0.05):
        return (scale * jax.random.normal(k, shape)).astype(jnp.float32)

    layers = []
    for kk in jax.random.split(k_w, NLAYERS):
        ks = jax.random.split(kk, 8)
        layers.append(dict(
            ln1w=jnp.ones((1, D), jnp.float32), ln1b=jnp.zeros((1, D), jnp.float32),
            wq=nrm(ks[0], (D, D)), wk=nrm(ks[1], (D, D)), wv=nrm(ks[2], (D, D)),
            bq=jnp.zeros((1, D), jnp.float32), bk=jnp.zeros((1, D), jnp.float32),
            bv=jnp.zeros((1, D), jnp.float32),
            wo=nrm(ks[3], (D, D)), bo=nrm(ks[4], (1, D), 0.01),
            ln2w=jnp.ones((1, D), jnp.float32), ln2b=jnp.zeros((1, D), jnp.float32),
            w1=nrm(ks[5], (DFF, D)), b1=nrm(ks[6], (1, DFF), 0.01),
            w2=nrm(ks[7], (D, DFF)), b2=jnp.zeros((1, D), jnp.float32),
        ))

    params = prepare_decoder_params(layers, NHEAD)          # one-time transform
    out = transformer_decoder(x, pos, padding_mask, attn_mask, params, NHEAD)
    out = jax.block_until_ready(out)

    ref = reference_forward(x, pos, padding_mask, attn_mask, layers, NHEAD)
    assert out.shape == (B, S, D)
    assert bool(jnp.all(jnp.isfinite(out)))
    # tolerance accounts for bf16 MXU operands (f32 accumulation) in the kernel
    assert bool(jnp.allclose(out, ref, atol=3e-2, rtol=3e-2)), \
        float(jnp.max(jnp.abs(out - ref)))
    print("KERNEL_OK")
</pallas_src>

<mosaic_0001>
module attributes {stable_mosaic.version = 11 : i64} {
  func.func @fused_decoder_kernel(%arg0: i32, %arg1: i32, %arg2: memref<1x8x32xf32, #tpu.memory_space<vmem>>, %arg3: memref<1x8x32xf32, #tpu.memory_space<vmem>>, %arg4: memref<1x8x8xf32, #tpu.memory_space<vmem>>, %arg5: memref<1x1x32xf32, #tpu.memory_space<vmem>>, %arg6: memref<1x1x32xf32, #tpu.memory_space<vmem>>, %arg7: memref<1x32x96xbf16, #tpu.memory_space<vmem>>, %arg8: memref<1x1x96xf32, #tpu.memory_space<vmem>>, %arg9: memref<1x32x32xbf16, #tpu.memory_space<vmem>>, %arg10: memref<1x1x32xf32, #tpu.memory_space<vmem>>, %arg11: memref<1x1x32xf32, #tpu.memory_space<vmem>>, %arg12: memref<1x1x32xf32, #tpu.memory_space<vmem>>, %arg13: memref<1x32x128xbf16, #tpu.memory_space<vmem>>, %arg14: memref<1x1x128xf32, #tpu.memory_space<vmem>>, %arg15: memref<1x128x32xbf16, #tpu.memory_space<vmem>>, %arg16: memref<1x1x32xf32, #tpu.memory_space<vmem>>, %arg17: memref<1x8x32xf32, #tpu.memory_space<vmem>>, %arg18: memref<8x32xf32, #tpu.memory_space<vmem>>) attributes {dimension_semantics = [#tpu.dimension_semantics<parallel>, #tpu.dimension_semantics<arbitrary>], iteration_bounds = array<i64: 2, 2>, scalar_prefetch = 0 : i64, scratch_operands = 1 : i64, tpu.core_type = #tpu.core_type<tc>, window_params = [{transform_indices = @transform_0, window_bounds = array<i64: 1, 8, 32>}, {pipeline_mode = #tpu.pipeline_mode<synchronous>, transform_indices = @transform_1, window_bounds = array<i64: 1, 8, 32>}, {transform_indices = @transform_2, window_bounds = array<i64: 1, 8, 8>}, {transform_indices = @transform_3, window_bounds = array<i64: 1, 1, 32>}, {transform_indices = @transform_4, window_bounds = array<i64: 1, 1, 32>}, {transform_indices = @transform_5, window_bounds = array<i64: 1, 32, 96>}, {transform_indices = @transform_6, window_bounds = array<i64: 1, 1, 96>}, {transform_indices = @transform_7, window_bounds = array<i64: 1, 32, 32>}, {transform_indices = @transform_8, window_bounds = array<i64: 1, 1, 32>}, {transform_indices = @transform_9, window_bounds = array<i64: 1, 1, 32>}, {transform_indices = @transform_10, window_bounds = array<i64: 1, 1, 32>}, {transform_indices = @transform_11, window_bounds = array<i64: 1, 32, 128>}, {transform_indices = @transform_12, window_bounds = array<i64: 1, 1, 128>}, {transform_indices = @transform_13, window_bounds = array<i64: 1, 128, 32>}, {transform_indices = @transform_14, window_bounds = array<i64: 1, 1, 32>}, {transform_indices = @transform_15, window_bounds = array<i64: 1, 8, 32>}]} {
    %c0_i32 = arith.constant 0 : i32
    %0 = arith.cmpi eq, %arg1, %c0_i32 : i32
    %1 = arith.extui %0 : i1 to i32
    %c0_i32_0 = arith.constant 0 : i32
    %2 = arith.cmpi ne, %1, %c0_i32_0 : i32
    scf.if %2 {
      %c0_62 = arith.constant 0 : index
      %c0_63 = arith.constant 0 : index
      %c0_64 = arith.constant 0 : index
      %124 = vector.load %arg2[%c0_62, %c0_63, %c0_64] : memref<1x8x32xf32, #tpu.memory_space<vmem>>, vector<1x8x32xf32>
      %125 = vector.shape_cast %124 : vector<1x8x32xf32> to vector<8x32xf32>
      %c0_65 = arith.constant 0 : index
      %c0_66 = arith.constant 0 : index
      %c0_67 = arith.constant 0 : index
      %126 = vector.load %arg3[%c0_65, %c0_66, %c0_67] : memref<1x8x32xf32, #tpu.memory_space<vmem>>, vector<1x8x32xf32>
      %127 = vector.shape_cast %126 : vector<1x8x32xf32> to vector<8x32xf32>
      %128 = arith.addf %125, %127 : vector<8x32xf32>
      %c0_68 = arith.constant 0 : index
      %c0_69 = arith.constant 0 : index
      %129 = vector.load %arg18[%c0_68, %c0_69] : memref<8x32xf32, #tpu.memory_space<vmem>>, vector<8x32xf32>
      tpu.vector_store %arg18[%c0_68, %c0_69], %128 {strides = array<i32>} : memref<8x32xf32, #tpu.memory_space<vmem>>, vector<8x32xf32>,
    } else {
    }
    %c0 = arith.constant 0 : index
    %c0_1 = arith.constant 0 : index
    %3 = vector.load %arg18[%c0, %c0_1] : memref<8x32xf32, #tpu.memory_space<vmem>>, vector<8x32xf32>
    %c0_2 = arith.constant 0 : index
    %c0_3 = arith.constant 0 : index
    %c0_4 = arith.constant 0 : index
    %4 = vector.load %arg5[%c0_2, %c0_3, %c0_4] : memref<1x1x32xf32, #tpu.memory_space<vmem>>, vector<1x1x32xf32>
    %5 = vector.shape_cast %4 : vector<1x1x32xf32> to vector<1x32xf32>
    %c0_5 = arith.constant 0 : index
    %c0_6 = arith.constant 0 : index
    %c0_7 = arith.constant 0 : index
    %6 = vector.load %arg6[%c0_5, %c0_6, %c0_7] : memref<1x1x32xf32, #tpu.memory_space<vmem>>, vector<1x1x32xf32>
    %7 = vector.shape_cast %6 : vector<1x1x32xf32> to vector<1x32xf32>
    %cst = arith.constant dense<0.000000e+00> : vector<8xf32>
    %8 = vector.multi_reduction <add>, %3, %cst [1] : vector<8x32xf32> to vector<8xf32>
    %9 = vector.shape_cast %8 : vector<8xf32> to vector<8x1xf32>
    %cst_8 = arith.constant 3.200000e+01 : f32
    %10 = vector.broadcast %cst_8 : f32 to vector<8x1xf32>
    %11 = arith.divf %9, %10 : vector<8x1xf32>
    %12 = vector.broadcast %11 : vector<8x1xf32> to vector<8x32xf32>
    %13 = arith.subf %3, %12 : vector<8x32xf32>
    %14 = arith.mulf %13, %13 : vector<8x32xf32>
    %cst_9 = arith.constant dense<0.000000e+00> : vector<8xf32>
    %15 = vector.multi_reduction <add>, %14, %cst_9 [1] : vector<8x32xf32> to vector<8xf32>
    %16 = vector.shape_cast %15 : vector<8xf32> to vector<8x1xf32>
    %cst_10 = arith.constant 3.200000e+01 : f32
    %17 = vector.broadcast %cst_10 : f32 to vector<8x1xf32>
    %18 = arith.divf %16, %17 : vector<8x1xf32>
    %19 = vector.broadcast %11 : vector<8x1xf32> to vector<8x32xf32>
    %20 = arith.subf %3, %19 : vector<8x32xf32>
    %cst_11 = arith.constant 9.99999974E-6 : f32
    %21 = vector.broadcast %cst_11 : f32 to vector<8x1xf32>
    %22 = arith.addf %18, %21 : vector<8x1xf32>
    %23 = math.rsqrt %22 : vector<8x1xf32>
    %24 = vector.broadcast %23 : vector<8x1xf32> to vector<8x32xf32>
    %25 = arith.mulf %20, %24 : vector<8x32xf32>
    %26 = vector.broadcast %5 : vector<1x32xf32> to vector<8x32xf32>
    %27 = arith.mulf %25, %26 : vector<8x32xf32>
    %28 = vector.broadcast %7 : vector<1x32xf32> to vector<8x32xf32>
    %29 = arith.addf %27, %28 : vector<8x32xf32>
    %30 = arith.truncf %29 : vector<8x32xf32> to vector<8x32xbf16>
    %c0_12 = arith.constant 0 : index
    %c0_13 = arith.constant 0 : index
    %c0_14 = arith.constant 0 : index
    %31 = vector.load %arg7[%c0_12, %c0_13, %c0_14] : memref<1x32x96xbf16, #tpu.memory_space<vmem>>, vector<1x32x96xbf16>
    %32 = vector.shape_cast %31 : vector<1x32x96xbf16> to vector<32x96xbf16>
    %cst_15 = arith.constant dense<0.000000e+00> : vector<8x96xf32>
    %33 = tpu.matmul %30, %32, %cst_15 {dimension_numbers = #tpu.dot_dimension_numbers<[1], [0], [0], [1], [0, 0, 1, 1], [], []>} : vector<8x32xbf16>, vector<32x96xbf16>, vector<8x96xf32> -> vector<8x96xf32>
    %c0_16 = arith.constant 0 : index
    %c0_17 = arith.constant 0 : index
    %c0_18 = arith.constant 0 : index
    %34 = vector.load %arg8[%c0_16, %c0_17, %c0_18] : memref<1x1x96xf32, #tpu.memory_space<vmem>>, vector<1x1x96xf32>
    %35 = vector.shape_cast %34 : vector<1x1x96xf32> to vector<1x96xf32>
    %36 = vector.broadcast %35 : vector<1x96xf32> to vector<8x96xf32>
    %37 = arith.addf %33, %36 : vector<8x96xf32>
    %38 = vector.extract_strided_slice %37 {offsets = [0, 0], sizes = [8, 32], strides = [1, 1]} : vector<8x96xf32> to vector<8x32xf32>
    %39 = vector.extract_strided_slice %37 {offsets = [0, 32], sizes = [8, 32], strides = [1, 1]} : vector<8x96xf32> to vector<8x32xf32>
    %40 = vector.extract_strided_slice %37 {offsets = [0, 64], sizes = [8, 32], strides = [1, 1]} : vector<8x96xf32> to vector<8x32xf32>
    %41 = vector.shape_cast %38 : vector<8x32xf32> to vector<8x4x8xf32>
    %42 = tpu.transpose %41, [1, 0, 2] : vector<8x4x8xf32> -> vector<4x8x8xf32>
    %43 = vector.shape_cast %39 : vector<8x32xf32> to vector<8x4x8xf32>
    %44 = tpu.transpose %43, [1, 0, 2] : vector<8x4x8xf32> -> vector<4x8x8xf32>
    %45 = vector.shape_cast %40 : vector<8x32xf32> to vector<8x4x8xf32>
    %46 = tpu.transpose %45, [1, 0, 2] : vector<8x4x8xf32> -> vector<4x8x8xf32>
    %c0_19 = arith.constant 0 : index
    %c0_20 = arith.constant 0 : index
    %c0_21 = arith.constant 0 : index
    %47 = vector.load %arg4[%c0_19, %c0_20, %c0_21] : memref<1x8x8xf32, #tpu.memory_space<vmem>>, vector<1x8x8xf32>
    %48 = vector.shape_cast %47 : vector<1x8x8xf32> to vector<8x8xf32>
    "tpu.trace_start"() <{level = 10 : i32, message = "hqd,hkd->hqk"}> : () -> ()
    %cst_22 = arith.constant dense<0.000000e+00> : vector<4x8x8xf32>
    %49 = tpu.matmul %42, %44, %cst_22 {dimension_numbers = #tpu.dot_dimension_numbers<[2], [2], [1], [1], [0, 0, 0, 1, 1, 1], [0], [0]>} : vector<4x8x8xf32>, vector<4x8x8xf32>, vector<4x8x8xf32> -> vector<4x8x8xf32>
    "tpu.trace_stop"() : () -> ()
    %50 = vector.shape_cast %48 : vector<8x8xf32> to vector<1x8x8xf32>
    %51 = vector.broadcast %50 : vector<1x8x8xf32> to vector<4x8x8xf32>
    %52 = arith.addf %49, %51 : vector<4x8x8xf32>
    %cst_23 = arith.constant dense<0xFF800000> : vector<4x8xf32>
    %53 = vector.multi_reduction <maximumf>, %52, %cst_23 [2] : vector<4x8x8xf32> to vector<4x8xf32>
    %54 = vector.shape_cast %53 : vector<4x8xf32> to vector<4x8x1xf32>
    %55 = vector.broadcast %54 : vector<4x8x1xf32> to vector<4x8x8xf32>
    %56 = arith.subf %52, %55 : vector<4x8x8xf32>
    %57 = math.exp %56 : vector<4x8x8xf32>
    %cst_24 = arith.constant dense<0.000000e+00> : vector<4x8xf32>
    %58 = vector.multi_reduction <add>, %57, %cst_24 [2] : vector<4x8x8xf32> to vector<4x8xf32>
    %59 = vector.shape_cast %58 : vector<4x8xf32> to vector<4x8x1xf32>
    %60 = tpu.reciprocal %59 {approx = true} : vector<4x8x1xf32> -> vector<4x8x1xf32>
    %61 = vector.broadcast %60 : vector<4x8x1xf32> to vector<4x8x8xf32>
    %62 = arith.mulf %57, %61 : vector<4x8x8xf32>
    "tpu.trace_start"() <{level = 10 : i32, message = "hqk,hkd->hqd"}> : () -> ()
    %cst_25 = arith.constant dense<0.000000e+00> : vector<4x8x8xf32>
    %63 = tpu.matmul %62, %46, %cst_25 {dimension_numbers = #tpu.dot_dimension_numbers<[2], [1], [1], [2], [0, 0, 0, 1, 1, 2], [0], [0]>} : vector<4x8x8xf32>, vector<4x8x8xf32>, vector<4x8x8xf32> -> vector<4x8x8xf32>
    "tpu.trace_stop"() : () -> ()
    %64 = tpu.transpose %63, [1, 0, 2] : vector<4x8x8xf32> -> vector<8x4x8xf32>
    %65 = vector.shape_cast %64 : vector<8x4x8xf32> to vector<8x32xf32>
    %66 = arith.truncf %65 : vector<8x32xf32> to vector<8x32xbf16>
    %c0_26 = arith.constant 0 : index
    %c0_27 = arith.constant 0 : index
    %c0_28 = arith.constant 0 : index
    %67 = vector.load %arg9[%c0_26, %c0_27, %c0_28] : memref<1x32x32xbf16, #tpu.memory_space<vmem>>, vector<1x32x32xbf16>
    %68 = vector.shape_cast %67 : vector<1x32x32xbf16> to vector<32x32xbf16>
    %cst_29 = arith.constant dense<0.000000e+00> : vector<8x32xf32>
    %69 = tpu.matmul %66, %68, %cst_29 {dimension_numbers = #tpu.dot_dimension_numbers<[1], [0], [0], [1], [0, 0, 1, 1], [], []>} : vector<8x32xbf16>, vector<32x32xbf16>, vector<8x32xf32> -> vector<8x32xf32>
    %c0_30 = arith.constant 0 : index
    %c0_31 = arith.constant 0 : index
    %c0_32 = arith.constant 0 : index
    %70 = vector.load %arg10[%c0_30, %c0_31, %c0_32] : memref<1x1x32xf32, #tpu.memory_space<vmem>>, vector<1x1x32xf32>
    %71 = vector.shape_cast %70 : vector<1x1x32xf32> to vector<1x32xf32>
    %72 = vector.broadcast %71 : vector<1x32xf32> to vector<8x32xf32>
    %73 = arith.addf %69, %72 : vector<8x32xf32>
    %74 = arith.addf %29, %73 : vector<8x32xf32>
    %c0_33 = arith.constant 0 : index
    %c0_34 = arith.constant 0 : index
    %c0_35 = arith.constant 0 : index
    %75 = vector.load %arg11[%c0_33, %c0_34, %c0_35] : memref<1x1x32xf32, #tpu.memory_space<vmem>>, vector<1x1x32xf32>
    %76 = vector.shape_cast %75 : vector<1x1x32xf32> to vector<1x32xf32>
    %c0_36 = arith.constant 0 : index
    %c0_37 = arith.constant 0 : index
    %c0_38 = arith.constant 0 : index
    %77 = vector.load %arg12[%c0_36, %c0_37, %c0_38] : memref<1x1x32xf32, #tpu.memory_space<vmem>>, vector<1x1x32xf32>
    %78 = vector.shape_cast %77 : vector<1x1x32xf32> to vector<1x32xf32>
    %cst_39 = arith.constant dense<0.000000e+00> : vector<8xf32>
    %79 = vector.multi_reduction <add>, %74, %cst_39 [1] : vector<8x32xf32> to vector<8xf32>
    %80 = vector.shape_cast %79 : vector<8xf32> to vector<8x1xf32>
    %cst_40 = arith.constant 3.200000e+01 : f32
    %81 = vector.broadcast %cst_40 : f32 to vector<8x1xf32>
    %82 = arith.divf %80, %81 : vector<8x1xf32>
    %83 = vector.broadcast %82 : vector<8x1xf32> to vector<8x32xf32>
    %84 = arith.subf %74, %83 : vector<8x32xf32>
    %85 = arith.mulf %84, %84 : vector<8x32xf32>
    %cst_41 = arith.constant dense<0.000000e+00> : vector<8xf32>
    %86 = vector.multi_reduction <add>, %85, %cst_41 [1] : vector<8x32xf32> to vector<8xf32>
    %87 = vector.shape_cast %86 : vector<8xf32> to vector<8x1xf32>
    %cst_42 = arith.constant 3.200000e+01 : f32
    %88 = vector.broadcast %cst_42 : f32 to vector<8x1xf32>
    %89 = arith.divf %87, %88 : vector<8x1xf32>
    %90 = vector.broadcast %82 : vector<8x1xf32> to vector<8x32xf32>
    %91 = arith.subf %74, %90 : vector<8x32xf32>
    %cst_43 = arith.constant 9.99999974E-6 : f32
    %92 = vector.broadcast %cst_43 : f32 to vector<8x1xf32>
    %93 = arith.addf %89, %92 : vector<8x1xf32>
    %94 = math.rsqrt %93 : vector<8x1xf32>
    %95 = vector.broadcast %94 : vector<8x1xf32> to vector<8x32xf32>
    %96 = arith.mulf %91, %95 : vector<8x32xf32>
    %97 = vector.broadcast %76 : vector<1x32xf32> to vector<8x32xf32>
    %98 = arith.mulf %96, %97 : vector<8x32xf32>
    %99 = vector.broadcast %78 : vector<1x32xf32> to vector<8x32xf32>
    %100 = arith.addf %98, %99 : vector<8x32xf32>
    %101 = arith.truncf %100 : vector<8x32xf32> to vector<8x32xbf16>
    %c0_44 = arith.constant 0 : index
    %c0_45 = arith.constant 0 : index
    %c0_46 = arith.constant 0 : index
    %102 = vector.load %arg13[%c0_44, %c0_45, %c0_46] : memref<1x32x128xbf16, #tpu.memory_space<vmem>>, vector<1x32x128xbf16>
    %103 = vector.shape_cast %102 : vector<1x32x128xbf16> to vector<32x128xbf16>
    %cst_47 = arith.constant dense<0.000000e+00> : vector<8x128xf32>
    %104 = tpu.matmul %101, %103, %cst_47 {dimension_numbers = #tpu.dot_dimension_numbers<[1], [0], [0], [1], [0, 0, 1, 1], [], []>} : vector<8x32xbf16>, vector<32x128xbf16>, vector<8x128xf32> -> vector<8x128xf32>
    %c0_48 = arith.constant 0 : index
    %c0_49 = arith.constant 0 : index
    %c0_50 = arith.constant 0 : index
    %105 = vector.load %arg14[%c0_48, %c0_49, %c0_50] : memref<1x1x128xf32, #tpu.memory_space<vmem>>, vector<1x1x128xf32>
    %106 = vector.shape_cast %105 : vector<1x1x128xf32> to vector<1x128xf32>
    %107 = vector.broadcast %106 : vector<1x128xf32> to vector<8x128xf32>
    %108 = arith.addf %104, %107 : vector<8x128xf32>
    %cst_51 = arith.constant 0.000000e+00 : f32
    %109 = vector.broadcast %cst_51 : f32 to vector<8x128xf32>
    %110 = arith.maximumf %108, %109 : vector<8x128xf32>
    %111 = arith.truncf %110 : vector<8x128xf32> to vector<8x128xbf16>
    %c0_52 = arith.constant 0 : index
    %c0_53 = arith.constant 0 : index
    %c0_54 = arith.constant 0 : index
    %112 = vector.load %arg15[%c0_52, %c0_53, %c0_54] : memref<1x128x32xbf16, #tpu.memory_space<vmem>>, vector<1x128x32xbf16>
    %113 = vector.shape_cast %112 : vector<1x128x32xbf16> to vector<128x32xbf16>
    %cst_55 = arith.constant dense<0.000000e+00> : vector<8x32xf32>
    %114 = tpu.matmul %111, %113, %cst_55 {dimension_numbers = #tpu.dot_dimension_numbers<[1], [0], [0], [1], [0, 0, 1, 1], [], []>} : vector<8x128xbf16>, vector<128x32xbf16>, vector<8x32xf32> -> vector<8x32xf32>
    %c0_56 = arith.constant 0 : index
    %c0_57 = arith.constant 0 : index
    %c0_58 = arith.constant 0 : index
    %115 = vector.load %arg16[%c0_56, %c0_57, %c0_58] : memref<1x1x32xf32, #tpu.memory_space<vmem>>, vector<1x1x32xf32>
    %116 = vector.shape_cast %115 : vector<1x1x32xf32> to vector<1x32xf32>
    %117 = vector.broadcast %116 : vector<1x32xf32> to vector<8x32xf32>
    %118 = arith.addf %114, %117 : vector<8x32xf32>
    %119 = arith.addf %100, %118 : vector<8x32xf32>
    %c0_59 = arith.constant 0 : index
    %c0_60 = arith.constant 0 : index
    %120 = vector.load %arg18[%c0_59, %c0_60] : memref<8x32xf32, #tpu.memory_space<vmem>>, vector<8x32xf32>
    tpu.vector_store %arg18[%c0_59, %c0_60], %119 {strides = array<i32>} : memref<8x32xf32, #tpu.memory_space<vmem>>, vector<8x32xf32>,
    %c1_i32 = arith.constant 1 : i32
    %121 = arith.cmpi eq, %arg1, %c1_i32 : i32
    %122 = arith.extui %121 : i1 to i32
    %c0_i32_61 = arith.constant 0 : i32
    %123 = arith.cmpi ne, %122, %c0_i32_61 : i32
    scf.if %123 {
      %c0_62 = arith.constant 0 : index
      %c0_63 = arith.constant 0 : index
      %c0_64 = arith.constant 0 : index
      %124 = vector.load %arg17[%c0_62, %c0_63, %c0_64] : memref<1x8x32xf32, #tpu.memory_space<vmem>>, vector<1x8x32xf32>
      %125 = vector.shape_cast %124 : vector<1x8x32xf32> to vector<8x32xf32>
      %126 = vector.shape_cast %119 : vector<8x32xf32> to vector<1x8x32xf32>
      tpu.vector_store %arg17[%c0_62, %c0_63, %c0_64], %126 {strides = array<i32>} : memref<1x8x32xf32, #tpu.memory_space<vmem>>, vector<1x8x32xf32>,
    } else {
    }
    return
  }
  func.func @transform_0(%arg0: i32, %arg1: i32) -> (i32, i32, i32) {
    %c0_i32 = arith.constant 0 : i32
    %c0_i32_0 = arith.constant 0 : i32
    %c0_i32_1 = arith.constant 0 : i32
    return %arg0, %c0_i32, %c0_i32_0 : i32, i32, i32
  }
  func.func @transform_1(%arg0: i32, %arg1: i32) -> (i32, i32, i32) {
    %c0_i32 = arith.constant 0 : i32
    %c0_i32_0 = arith.constant 0 : i32
    %c0_i32_1 = arith.constant 0 : i32
    %c0_i32_2 = arith.constant 0 : i32
    return %c0_i32, %c0_i32_0, %c0_i32_1 : i32, i32, i32
  }
  func.func @transform_2(%arg0: i32, %arg1: i32) -> (i32, i32, i32) {
    %c0_i32 = arith.constant 0 : i32
    %c0_i32_0 = arith.constant 0 : i32
    %c0_i32_1 = arith.constant 0 : i32
    return %arg0, %c0_i32, %c0_i32_0 : i32, i32, i32
  }
  func.func @transform_3(%arg0: i32, %arg1: i32) -> (i32, i32, i32) {
    %c0_i32 = arith.constant 0 : i32
    %c0_i32_0 = arith.constant 0 : i32
    %c0_i32_1 = arith.constant 0 : i32
    return %arg1, %c0_i32, %c0_i32_0 : i32, i32, i32
  }
  func.func @transform_4(%arg0: i32, %arg1: i32) -> (i32, i32, i32) {
    %c0_i32 = arith.constant 0 : i32
    %c0_i32_0 = arith.constant 0 : i32
    %c0_i32_1 = arith.constant 0 : i32
    return %arg1, %c0_i32, %c0_i32_0 : i32, i32, i32
  }
  func.func @transform_5(%arg0: i32, %arg1: i32) -> (i32, i32, i32) {
    %c0_i32 = arith.constant 0 : i32
    %c0_i32_0 = arith.constant 0 : i32
    %c0_i32_1 = arith.constant 0 : i32
    return %arg1, %c0_i32, %c0_i32_0 : i32, i32, i32
  }
  func.func @transform_6(%arg0: i32, %arg1: i32) -> (i32, i32, i32) {
    %c0_i32 = arith.constant 0 : i32
    %c0_i32_0 = arith.constant 0 : i32
    %c0_i32_1 = arith.constant 0 : i32
    return %arg1, %c0_i32, %c0_i32_0 : i32, i32, i32
  }
  func.func @transform_7(%arg0: i32, %arg1: i32) -> (i32, i32, i32) {
    %c0_i32 = arith.constant 0 : i32
    %c0_i32_0 = arith.constant 0 : i32
    %c0_i32_1 = arith.constant 0 : i32
    return %arg1, %c0_i32, %c0_i32_0 : i32, i32, i32
  }
  func.func @transform_8(%arg0: i32, %arg1: i32) -> (i32, i32, i32) {
    %c0_i32 = arith.constant 0 : i32
    %c0_i32_0 = arith.constant 0 : i32
    %c0_i32_1 = arith.constant 0 : i32
    return %arg1, %c0_i32, %c0_i32_0 : i32, i32, i32
  }
  func.func @transform_9(%arg0: i32, %arg1: i32) -> (i32, i32, i32) {
    %c0_i32 = arith.constant 0 : i32
    %c0_i32_0 = arith.constant 0 : i32
    %c0_i32_1 = arith.constant 0 : i32
    return %arg1, %c0_i32, %c0_i32_0 : i32, i32, i32
  }
  func.func @transform_10(%arg0: i32, %arg1: i32) -> (i32, i32, i32) {
    %c0_i32 = arith.constant 0 : i32
    %c0_i32_0 = arith.constant 0 : i32
    %c0_i32_1 = arith.constant 0 : i32
    return %arg1, %c0_i32, %c0_i32_0 : i32, i32, i32
  }
  func.func @transform_11(%arg0: i32, %arg1: i32) -> (i32, i32, i32) {
    %c0_i32 = arith.constant 0 : i32
    %c0_i32_0 = arith.constant 0 : i32
    %c0_i32_1 = arith.constant 0 : i32
    return %arg1, %c0_i32, %c0_i32_0 : i32, i32, i32
  }
  func.func @transform_12(%arg0: i32, %arg1: i32) -> (i32, i32, i32) {
    %c0_i32 = arith.constant 0 : i32
    %c0_i32_0 = arith.constant 0 : i32
    %c0_i32_1 = arith.constant 0 : i32
    return %arg1, %c0_i32, %c0_i32_0 : i32, i32, i32
  }
  func.func @transform_13(%arg0: i32, %arg1: i32) -> (i32, i32, i32) {
    %c0_i32 = arith.constant 0 : i32
    %c0_i32_0 = arith.constant 0 : i32
    %c0_i32_1 = arith.constant 0 : i32
    return %arg1, %c0_i32, %c0_i32_0 : i32, i32, i32
  }
  func.func @transform_14(%arg0: i32, %arg1: i32) -> (i32, i32, i32) {
    %c0_i32 = arith.constant 0 : i32
    %c0_i32_0 = arith.constant 0 : i32
    %c0_i32_1 = arith.constant 0 : i32
    return %arg1, %c0_i32, %c0_i32_0 : i32, i32, i32
  }
  func.func @transform_15(%arg0: i32, %arg1: i32) -> (i32, i32, i32) {
    %c0_i32 = arith.constant 0 : i32
    %c0_i32_0 = arith.constant 0 : i32
    %c0_i32_1 = arith.constant 0 : i32
    return %arg0, %c0_i32, %c0_i32_0 : i32, i32, i32
  }
}

</mosaic_0001>

<llo_original>
// kernel: tpu_custom_call.1
$region0: #{tpu_custom_call.1}
  #allocation0 [shape = 'u32[]', space=smem, size = 0x4, offset = 0x4, fixed_abs, tag = 'smem constant byte address 0x4 - core index']
  #allocation1 [shape = 'u32[144,128]{1,0:T(1,128)}', space=vmem, size = 0x12000, scoped, tag = 'internal scratch']
  #allocation2 [shape = 'f32[8,32]{1,0:T(8,128)}', space=vmem, size = 0x1000, scoped, tag = 'scratch operand']
  %s0 = inlined_call_operand.vmem [shape: f32[2,8,32], index: 0, kind: input, shape index: {}]
  %s1 = inlined_call_operand.vmem [shape: f32[1,8,32], index: 1, kind: input, shape index: {}]
  %s2 = inlined_call_operand.vmem [shape: f32[2,8,8], index: 2, kind: input, shape index: {}]
  %s3 = inlined_call_operand.vmem [shape: f32[2,1,32], index: 3, kind: input, shape index: {}]
  %s4 = inlined_call_operand.vmem [shape: f32[2,1,32], index: 4, kind: input, shape index: {}]
  %s5 = inlined_call_operand.vmem [shape: bf16[2,32,96], index: 5, kind: input, shape index: {}]
  %s6 = inlined_call_operand.vmem [shape: f32[2,1,96], index: 6, kind: input, shape index: {}]
  %s7 = inlined_call_operand.vmem [shape: bf16[2,32,32], index: 7, kind: input, shape index: {}]
  %s8 = inlined_call_operand.vmem [shape: f32[2,1,32], index: 8, kind: input, shape index: {}]
  %s9 = inlined_call_operand.vmem [shape: f32[2,1,32], index: 9, kind: input, shape index: {}]
  %s10 = inlined_call_operand.vmem [shape: f32[2,1,32], index: 10, kind: input, shape index: {}]
  %s11 = inlined_call_operand.vmem [shape: bf16[2,32,128], index: 11, kind: input, shape index: {}]
  %s12 = inlined_call_operand.vmem [shape: f32[2,1,128], index: 12, kind: input, shape index: {}]
  %s13 = inlined_call_operand.vmem [shape: bf16[2,128,32], index: 13, kind: input, shape index: {}]
  %s14 = inlined_call_operand.vmem [shape: f32[2,1,32], index: 14, kind: input, shape index: {}]
  %s15 = inlined_call_operand.hbm [shape: f32[2,8,32], index: 15, kind: output, shape index: {}]
  %s16 = sld [smem:[#allocation0]]
  $region101: #{tpu_custom_call.1} parent=0
    _
  %s18 = ssub.s32 1, %s16
  %s19 = scalar_select 0, %s18, %s16
  $region1: #{tpu_custom_call.1} parent=0
    #allocation3 [shape = 'u8[8192]{0}', space=vmem, size = 0x2000, scoped, tag = 'output window, operand 0']
    #allocation4 [shape = 's32[2]{0}', space=sflag, size = 0x8, scoped, tag = 'scoped memory for tpu_custom_call.1']
    %20 = vsyncpa [#allocation4], 0
    %s21 = scalar_lea.sflag [#allocation4], 1
    %22 = vsyncpa %s21, 0
    loop: start=0, step=1, limit=6
    $region2: #{tpu_custom_call.1} parent=1 // loop_pre_header
      _
    $region3: #{tpu_custom_call.1} parent=1 // loop_header
      %s24 = sphi 0, %s28
      %p25 = scmp.ge.s32.totalorder %s24, 6
      %s31 = sphi 0, %s43
      %s32 = sphi 0, %s39
      %s33 = sphi 0, %s31
      %s34 = sphi 0, %s32
      %s35 = sphi 0, %s33
      %s36 = sphi 0, %s34
      %s46 = sphi 0, %s48
      %s49 = sphi 0, %s46
      %s50 = sphi 0, %s49
      %s66 = sphi 0, %s50
      %s70 = sphi 0, %s70
      %s72 = sphi 0, %s70
      %s73 = sphi 0, %s72
      %s87 = sphi 0, %s73
      %s93 = sphi 0, %s95
      %s96 = sphi 0, %s93
      %s97 = sphi 0, %s96
      %s113 = sphi 0, %s97
      %s119 = sphi 0, %s121
      %s122 = sphi 0, %s119
      %s123 = sphi 0, %s122
      %s139 = sphi 0, %s123
      %s145 = sphi 0, %s147
      %s148 = sphi 0, %s145
      %s149 = sphi 0, %s148
      %s165 = sphi 0, %s149
      %s171 = sphi 0, %s173
      %s174 = sphi 0, %s171
      %s175 = sphi 0, %s174
      %s191 = sphi 0, %s175
      %s197 = sphi 0, %s199
      %s200 = sphi 0, %s197
      %s201 = sphi 0, %s200
      %s217 = sphi 0, %s201
      %s223 = sphi 0, %s225
      %s226 = sphi 0, %s223
      %s227 = sphi 0, %s226
      %s243 = sphi 0, %s227
      %s249 = sphi 0, %s251
      %s252 = sphi 0, %s249
      %s253 = sphi 0, %s252
      %s269 = sphi 0, %s253
      %s275 = sphi 0, %s277
      %s278 = sphi 0, %s275
      %s279 = sphi 0, %s278
      %s295 = sphi 0, %s279
      %s301 = sphi 0, %s303
      %s304 = sphi 0, %s301
      %s305 = sphi 0, %s304
      %s321 = sphi 0, %s305
      %s327 = sphi 0, %s329
      %s330 = sphi 0, %s327
      %s331 = sphi 0, %s330
      %s347 = sphi 0, %s331
      %s353 = sphi 0, %s355
      %s356 = sphi 0, %s353
      %s357 = sphi 0, %s356
      %s373 = sphi 0, %s357
      %s379 = sphi 0, %s381
      %s382 = sphi 0, %s379
      %s383 = sphi 0, %s382
      %s399 = sphi 0, %s383
      %s405 = sphi 0, %s407
      %s408 = sphi 0, %s405
      %s409 = sphi 0, %s408
      %s425 = sphi 0, %s409
      %s431 = sphi 0, %s433
      %s434 = sphi 0, %s431
      %s435 = sphi 0, %s434
      %s451 = sphi 0, %s435
    $region4: #{tpu_custom_call.1} parent=1 // loop_header_branch
      %27 = sbr.rel (%p25) target = $region8
    $region5: #{tpu_custom_call.1} parent=1 // loop_body
      %s29 = ssub.s32 %s24, 1
      %s30 = ssub.s32 %s24, 2
      %s37 = sadd.s32 1, %s32
      %p38 = scmp.ge.s32.totalorder %s37, 2
      %s39 = scalar_select %p38, 0, %s37
      %s40 = sadd.s32 1, %s31
      %s41 = scalar_select %p38, %s40, %s31
      %p42 = scmp.ge.s32.totalorder %s41, 2
      %s43 = scalar_select %p42, 0, %s41
      %s44 = ssub.s32 %s31, %s43
      %p45 = scmp.eq.s32.totalorder %s44, 0
      %s47 = sadd.s32 %s46, 1
      %s48 = scalar_select %p45, %s46, %s47
      %p51 = pneg %p45
      %p52 = scmp.eq.s32.totalorder %s24, 3
      %p53 = por %p51, %p52
      %p54 = scmp.ne.s32.totalorder %s46, %s49
      %p55 = scmp.eq.s32.totalorder %s24, 0
      %p56 = por %p54, %p55
      %p57 = scmp.ne.s32.totalorder %s46, %s49
      %p58 = scmp.eq.s32.totalorder %s29, 3
      %p59 = por %p57, %p58
      %p60 = scmp.ne.s32.totalorder %s49, %s50
      %p61 = scmp.eq.s32.totalorder %s29, 0
      %p62 = por %p60, %p61
      %p63 = scmp.ne.s32.totalorder %s49, %s50
      %p64 = scmp.eq.s32.totalorder %s30, 3
      %p65 = por %p63, %p64
      %p67 = scmp.ne.s32.totalorder %s50, %s66
      %p68 = scmp.eq.s32.totalorder %s30, 0
      %p69 = por %p67, %p68
      %s71 = sadd.s32 %s70, 1
      %p74 = scmp.eq.s32.totalorder %s24, 3
      %p75 = scmp.ne.s32.totalorder %s70, %s72
      %p76 = scmp.eq.s32.totalorder %s24, 0
      %p77 = por %p75, %p76
      %p78 = scmp.ne.s32.totalorder %s70, %s72
      %p79 = scmp.eq.s32.totalorder %s29, 3
      %p80 = por %p78, %p79
      %p81 = scmp.ne.s32.totalorder %s72, %s73
      %p82 = scmp.eq.s32.totalorder %s29, 0
      %p83 = por %p81, %p82
      %p84 = scmp.ne.s32.totalorder %s72, %s73
      %p85 = scmp.eq.s32.totalorder %s30, 3
      %p86 = por %p84, %p85
      %p88 = scmp.ne.s32.totalorder %s73, %s87
      %p89 = scmp.eq.s32.totalorder %s30, 0
      %p90 = por %p88, %p89
      %s91 = ssub.s32 %s31, %s43
      %p92 = scmp.eq.s32.totalorder %s91, 0
      %s94 = sadd.s32 %s93, 1
      %s95 = scalar_select %p92, %s93, %s94
      %p98 = pneg %p92
      %p99 = scmp.eq.s32.totalorder %s24, 3
      %p100 = por %p98, %p99
      %p101 = scmp.ne.s32.totalorder %s93, %s96
      %p102 = scmp.eq.s32.totalorder %s24, 0
      %p103 = por %p101, %p102
      %p104 = scmp.ne.s32.totalorder %s93, %s96
      %p105 = scmp.eq.s32.totalorder %s29, 3
      %p106 = por %p104, %p105
      %p107 = scmp.ne.s32.totalorder %s96, %s97
      %p108 = scmp.eq.s32.totalorder %s29, 0
      %p109 = por %p107, %p108
      %p110 = scmp.ne.s32.totalorder %s96, %s97
      %p111 = scmp.eq.s32.totalorder %s30, 3
      %p112 = por %p110, %p111
      %p114 = scmp.ne.s32.totalorder %s97, %s113
      %p115 = scmp.eq.s32.totalorder %s30, 0
      %p116 = por %p114, %p115
      %s117 = ssub.s32 %s32, %s39
      %p118 = scmp.eq.s32.totalorder %s117, 0
      %s120 = sadd.s32 %s119, 1
      %s121 = scalar_select %p118, %s119, %s120
      %p124 = pneg %p118
      %p125 = scmp.eq.s32.totalorder %s24, 3
      %p126 = por %p124, %p125
      %p127 = scmp.ne.s32.totalorder %s119, %s122
      %p128 = scmp.eq.s32.totalorder %s24, 0
      %p129 = por %p127, %p128
      %p130 = scmp.ne.s32.totalorder %s119, %s122
      %p131 = scmp.eq.s32.totalorder %s29, 3
      %p132 = por %p130, %p131
      %p133 = scmp.ne.s32.totalorder %s122, %s123
      %p134 = scmp.eq.s32.totalorder %s29, 0
      %p135 = por %p133, %p134
      %p136 = scmp.ne.s32.totalorder %s122, %s123
      %p137 = scmp.eq.s32.totalorder %s30, 3
      %p138 = por %p136, %p137
      %p140 = scmp.ne.s32.totalorder %s123, %s139
      %p141 = scmp.eq.s32.totalorder %s30, 0
      %p142 = por %p140, %p141
      %s143 = ssub.s32 %s32, %s39
      %p144 = scmp.eq.s32.totalorder %s143, 0
      %s146 = sadd.s32 %s145, 1
      %s147 = scalar_select %p144, %s145, %s146
      %p150 = pneg %p144
      %p151 = scmp.eq.s32.totalorder %s24, 3
      %p152 = por %p150, %p151
      %p153 = scmp.ne.s32.totalorder %s145, %s148
      %p154 = scmp.eq.s32.totalorder %s24, 0
      %p155 = por %p153, %p154
      %p156 = scmp.ne.s32.totalorder %s145, %s148
      %p157 = scmp.eq.s32.totalorder %s29, 3
      %p158 = por %p156, %p157
      %p159 = scmp.ne.s32.totalorder %s148, %s149
      %p160 = scmp.eq.s32.totalorder %s29, 0
      %p161 = por %p159, %p160
      %p162 = scmp.ne.s32.totalorder %s148, %s149
      %p163 = scmp.eq.s32.totalorder %s30, 3
      %p164 = por %p162, %p163
      %p166 = scmp.ne.s32.totalorder %s149, %s165
      %p167 = scmp.eq.s32.totalorder %s30, 0
      %p168 = por %p166, %p167
      %s169 = ssub.s32 %s32, %s39
      %p170 = scmp.eq.s32.totalorder %s169, 0
      %s172 = sadd.s32 %s171, 1
      %s173 = scalar_select %p170, %s171, %s172
      %p176 = pneg %p170
      %p177 = scmp.eq.s32.totalorder %s24, 3
      %p178 = por %p176, %p177
      %p179 = scmp.ne.s32.totalorder %s171, %s174
      %p180 = scmp.eq.s32.totalorder %s24, 0
      %p181 = por %p179, %p180
      %p182 = scmp.ne.s32.totalorder %s171, %s174
      %p183 = scmp.eq.s32.totalorder %s29, 3
      %p184 = por %p182, %p183
      %p185 = scmp.ne.s32.totalorder %s174, %s175
      %p186 = scmp.eq.s32.totalorder %s29, 0
      %p187 = por %p185, %p186
      %p188 = scmp.ne.s32.totalorder %s174, %s175
      %p189 = scmp.eq.s32.totalorder %s30, 3
      %p190 = por %p188, %p189
      %p192 = scmp.ne.s32.totalorder %s175, %s191
      %p193 = scmp.eq.s32.totalorder %s30, 0
      %p194 = por %p192, %p193
      %s195 = ssub.s32 %s32, %s39
      %p196 = scmp.eq.s32.totalorder %s195, 0
      %s198 = sadd.s32 %s197, 1
      %s199 = scalar_select %p196, %s197, %s198
      %p202 = pneg %p196
      %p203 = scmp.eq.s32.totalorder %s24, 3
      %p204 = por %p202, %p203
      %p205 = scmp.ne.s32.totalorder %s197, %s200
      %p206 = scmp.eq.s32.totalorder %s24, 0
      %p207 = por %p205, %p206
      %p208 = scmp.ne.s32.totalorder %s197, %s200
      %p209 = scmp.eq.s32.totalorder %s29, 3
      %p210 = por %p208, %p209
      %p211 = scmp.ne.s32.totalorder %s200, %s201
      %p212 = scmp.eq.s32.totalorder %s29, 0
      %p213 = por %p211, %p212
      %p214 = scmp.ne.s32.totalorder %s200, %s201
      %p215 = scmp.eq.s32.totalorder %s30, 3
      %p216 = por %p214, %p215
      %p218 = scmp.ne.s32.totalorder %s201, %s217
      %p219 = scmp.eq.s32.totalorder %s30, 0
      %p220 = por %p218, %p219
      %s221 = ssub.s32 %s32, %s39
      %p222 = scmp.eq.s32.totalorder %s221, 0
      %s224 = sadd.s32 %s223, 1
      %s225 = scalar_select %p222, %s223, %s224
      %p228 = pneg %p222
      %p229 = scmp.eq.s32.totalorder %s24, 3
      %p230 = por %p228, %p229
      %p231 = scmp.ne.s32.totalorder %s223, %s226
      %p232 = scmp.eq.s32.totalorder %s24, 0
      %p233 = por %p231, %p232
      %p234 = scmp.ne.s32.totalorder %s223, %s226
      %p235 = scmp.eq.s32.totalorder %s29, 3
      %p236 = por %p234, %p235
      %p237 = scmp.ne.s32.totalorder %s226, %s227
      %p238 = scmp.eq.s32.totalorder %s29, 0
      %p239 = por %p237, %p238
      %p240 = scmp.ne.s32.totalorder %s226, %s227
      %p241 = scmp.eq.s32.totalorder %s30, 3
      %p242 = por %p240, %p241
      %p244 = scmp.ne.s32.totalorder %s227, %s243
      %p245 = scmp.eq.s32.totalorder %s30, 0
      %p246 = por %p244, %p245
      %s247 = ssub.s32 %s32, %s39
      %p248 = scmp.eq.s32.totalorder %s247, 0
      %s250 = sadd.s32 %s249, 1
      %s251 = scalar_select %p248, %s249, %s250
      %p254 = pneg %p248
      %p255 = scmp.eq.s32.totalorder %s24, 3
      %p256 = por %p254, %p255
      %p257 = scmp.ne.s32.totalorder %s249, %s252
      %p258 = scmp.eq.s32.totalorder %s24, 0
      %p259 = por %p257, %p258
      %p260 = scmp.ne.s32.totalorder %s249, %s252
      %p261 = scmp.eq.s32.totalorder %s29, 3
      %p262 = por %p260, %p261
      %p263 = scmp.ne.s32.totalorder %s252, %s253
      %p264 = scmp.eq.s32.totalorder %s29, 0
      %p265 = por %p263, %p264
      %p266 = scmp.ne.s32.totalorder %s252, %s253
      %p267 = scmp.eq.s32.totalorder %s30, 3
      %p268 = por %p266, %p267
      %p270 = scmp.ne.s32.totalorder %s253, %s269
      %p271 = scmp.eq.s32.totalorder %s30, 0
      %p272 = por %p270, %p271
      %s273 = ssub.s32 %s32, %s39
      %p274 = scmp.eq.s32.totalorder %s273, 0
      %s276 = sadd.s32 %s275, 1
      %s277 = scalar_select %p274, %s275, %s276
      %p280 = pneg %p274
      %p281 = scmp.eq.s32.totalorder %s24, 3
      %p282 = por %p280, %p281
      %p283 = scmp.ne.s32.totalorder %s275, %s278
      %p284 = scmp.eq.s32.totalorder %s24, 0
      %p285 = por %p283, %p284
      %p286 = scmp.ne.s32.totalorder %s275, %s278
      %p287 = scmp.eq.s32.totalorder %s29, 3
      %p288 = por %p286, %p287
      %p289 = scmp.ne.s32.totalorder %s278, %s279
      %p290 = scmp.eq.s32.totalorder %s29, 0
      %p291 = por %p289, %p290
      %p292 = scmp.ne.s32.totalorder %s278, %s279
      %p293 = scmp.eq.s32.totalorder %s30, 3
      %p294 = por %p292, %p293
      %p296 = scmp.ne.s32.totalorder %s279, %s295
      %p297 = scmp.eq.s32.totalorder %s30, 0
      %p298 = por %p296, %p297
      %s299 = ssub.s32 %s32, %s39
      %p300 = scmp.eq.s32.totalorder %s299, 0
      %s302 = sadd.s32 %s301, 1
      %s303 = scalar_select %p300, %s301, %s302
      %p306 = pneg %p300
      %p307 = scmp.eq.s32.totalorder %s24, 3
      %p308 = por %p306, %p307
      %p309 = scmp.ne.s32.totalorder %s301, %s304
      %p310 = scmp.eq.s32.totalorder %s24, 0
      %p311 = por %p309, %p310
      %p312 = scmp.ne.s32.totalorder %s301, %s304
      %p313 = scmp.eq.s32.totalorder %s29, 3
      %p314 = por %p312, %p313
      %p315 = scmp.ne.s32.totalorder %s304, %s305
      %p316 = scmp.eq.s32.totalorder %s29, 0
      %p317 = por %p315, %p316
      %p318 = scmp.ne.s32.totalorder %s304, %s305
      %p319 = scmp.eq.s32.totalorder %s30, 3
      %p320 = por %p318, %p319
      %p322 = scmp.ne.s32.totalorder %s305, %s321
      %p323 = scmp.eq.s32.totalorder %s30, 0
      %p324 = por %p322, %p323
      %s325 = ssub.s32 %s32, %s39
      %p326 = scmp.eq.s32.totalorder %s325, 0
      %s328 = sadd.s32 %s327, 1
      %s329 = scalar_select %p326, %s327, %s328
      %p332 = pneg %p326
      %p333 = scmp.eq.s32.totalorder %s24, 3
      %p334 = por %p332, %p333
      %p335 = scmp.ne.s32.totalorder %s327, %s330
      %p336 = scmp.eq.s32.totalorder %s24, 0
      %p337 = por %p335, %p336
      %p338 = scmp.ne.s32.totalorder %s327, %s330
      %p339 = scmp.eq.s32.totalorder %s29, 3
      %p340 = por %p338, %p339
      %p341 = scmp.ne.s32.totalorder %s330, %s331
      %p342 = scmp.eq.s32.totalorder %s29, 0
      %p343 = por %p341, %p342
      %p344 = scmp.ne.s32.totalorder %s330, %s331
      %p345 = scmp.eq.s32.totalorder %s30, 3
      %p346 = por %p344, %p345
      %p348 = scmp.ne.s32.totalorder %s331, %s347
      %p349 = scmp.eq.s32.totalorder %s30, 0
      %p350 = por %p348, %p349
      %s351 = ssub.s32 %s32, %s39
      %p352 = scmp.eq.s32.totalorder %s351, 0
      %s354 = sadd.s32 %s353, 1
      %s355 = scalar_select %p352, %s353, %s354
      %p358 = pneg %p352
      %p359 = scmp.eq.s32.totalorder %s24, 3
      %p360 = por %p358, %p359
      %p361 = scmp.ne.s32.totalorder %s353, %s356
      %p362 = scmp.eq.s32.totalorder %s24, 0
      %p363 = por %p361, %p362
      %p364 = scmp.ne.s32.totalorder %s353, %s356
      %p365 = scmp.eq.s32.totalorder %s29, 3
      %p366 = por %p364, %p365
      %p367 = scmp.ne.s32.totalorder %s356, %s357
      %p368 = scmp.eq.s32.totalorder %s29, 0
      %p369 = por %p367, %p368
      %p370 = scmp.ne.s32.totalorder %s356, %s357
      %p371 = scmp.eq.s32.totalorder %s30, 3
      %p372 = por %p370, %p371
      %p374 = scmp.ne.s32.totalorder %s357, %s373
      %p375 = scmp.eq.s32.totalorder %s30, 0
      %p376 = por %p374, %p375
      %s377 = ssub.s32 %s32, %s39
      %p378 = scmp.eq.s32.totalorder %s377, 0
      %s380 = sadd.s32 %s379, 1
      %s381 = scalar_select %p378, %s379, %s380
      %p384 = pneg %p378
      %p385 = scmp.eq.s32.totalorder %s24, 3
      %p386 = por %p384, %p385
      %p387 = scmp.ne.s32.totalorder %s379, %s382
      %p388 = scmp.eq.s32.totalorder %s24, 0
      %p389 = por %p387, %p388
      %p390 = scmp.ne.s32.totalorder %s379, %s382
      %p391 = scmp.eq.s32.totalorder %s29, 3
      %p392 = por %p390, %p391
      %p393 = scmp.ne.s32.totalorder %s382, %s383
      %p394 = scmp.eq.s32.totalorder %s29, 0
      %p395 = por %p393, %p394
      %p396 = scmp.ne.s32.totalorder %s382, %s383
      %p397 = scmp.eq.s32.totalorder %s30, 3
      %p398 = por %p396, %p397
      %p400 = scmp.ne.s32.totalorder %s383, %s399
      %p401 = scmp.eq.s32.totalorder %s30, 0
      %p402 = por %p400, %p401
      %s403 = ssub.s32 %s32, %s39
      %p404 = scmp.eq.s32.totalorder %s403, 0
      %s406 = sadd.s32 %s405, 1
      %s407 = scalar_select %p404, %s405, %s406
      %p410 = pneg %p404
      %p411 = scmp.eq.s32.totalorder %s24, 3
      %p412 = por %p410, %p411
      %p413 = scmp.ne.s32.totalorder %s405, %s408
      %p414 = scmp.eq.s32.totalorder %s24, 0
      %p415 = por %p413, %p414
      %p416 = scmp.ne.s32.totalorder %s405, %s408
      %p417 = scmp.eq.s32.totalorder %s29, 3
      %p418 = por %p416, %p417
      %p419 = scmp.ne.s32.totalorder %s408, %s409
      %p420 = scmp.eq.s32.totalorder %s29, 0
      %p421 = por %p419, %p420
      %p422 = scmp.ne.s32.totalorder %s408, %s409
      %p423 = scmp.eq.s32.totalorder %s30, 3
      %p424 = por %p422, %p423
      %p426 = scmp.ne.s32.totalorder %s409, %s425
      %p427 = scmp.eq.s32.totalorder %s30, 0
      %p428 = por %p426, %p427
      %s429 = ssub.s32 %s31, %s43
      %p430 = scmp.eq.s32.totalorder %s429, 0
      %s432 = sadd.s32 %s431, 1
      %s433 = scalar_select %p430, %s431, %s432
      %p436 = pneg %p430
      %p437 = scmp.eq.s32.totalorder %s24, 3
      %p438 = por %p436, %p437
      %p439 = scmp.ne.s32.totalorder %s431, %s434
      %p440 = scmp.eq.s32.totalorder %s24, 0
      %p441 = por %p439, %p440
      %p442 = scmp.ne.s32.totalorder %s431, %s434
      %p443 = scmp.eq.s32.totalorder %s29, 3
      %p444 = por %p442, %p443
      %p445 = scmp.ne.s32.totalorder %s434, %s435
      %p446 = scmp.eq.s32.totalorder %s29, 0
      %p447 = por %p445, %p446
      %p448 = scmp.ne.s32.totalorder %s434, %s435
      %p449 = scmp.eq.s32.totalorder %s30, 3
      %p450 = por %p448, %p449
      %p452 = scmp.ne.s32.totalorder %s435, %s451
      %p453 = scmp.eq.s32.totalorder %s30, 0
      %p454 = por %p452, %p453
      %p455 = scmp.le.s32.totalorder 1, %s24
      %p456 = scmp.lt.s32.totalorder %s24, 5
      %p457 = pnand %p455, %p456
      %p458 = pneg %p457
      // Predicated region
      $region9: #{tpu_custom_call.1} parent=5 // pred_check
        _
      $region10: #{tpu_custom_call.1} parent=5 // pred_check_branch
        %460 = sbr.rel (%p457) target = $region12
      $region11: #{tpu_custom_call.1} parent=5 // pred_region
        %s461 = ssub.s32 %s24, 1
        // Predicated region
        $region13: #{tpu_custom_call.1} parent=11 // pred_check
          %p462 = pneg %p83
        $region14: #{tpu_custom_call.1} parent=11 // pred_check_branch
          %464 = sbr.rel (%p462) target = $region16
        $region15: #{tpu_custom_call.1} parent=11 // pred_region
          _
        $region16: #{tpu_custom_call.1} parent=11 // pred_fallthru
          _
      $region12: #{tpu_custom_call.1} parent=5 // pred_fallthru
        _
      %p465 = scmp.lt.s32.totalorder %s24, 4
      // Predicated region
      $region17: #{tpu_custom_call.1} parent=5 // pred_check
        %p466 = pneg %p465
      $region18: #{tpu_custom_call.1} parent=5 // pred_check_branch
        %468 = sbr.rel (%p466) target = $region20
      $region19: #{tpu_custom_call.1} parent=5 // pred_region
        // Predicated region
        $region21: #{tpu_custom_call.1} parent=19 // pred_check
          %p469 = pneg %p56
        $region22: #{tpu_custom_call.1} parent=19 // pred_check_branch
          %471 = sbr.rel (%p469) target = $region24
        $region23: #{tpu_custom_call.1} parent=19 // pred_region
          %p472 = scmp.lt.s32.totalorder %s31, 1
          %s473 = scalar_select %p472, %s31, 1
          %s474 = smul.addr %s473, 8
          %s475 = scalar_lea.vmem %s0, %s474
        $region24: #{tpu_custom_call.1} parent=19 // pred_fallthru
          _
        // Predicated region
        $region25: #{tpu_custom_call.1} parent=19 // pred_check
          %p476 = pneg %p103
        $region26: #{tpu_custom_call.1} parent=19 // pred_check_branch
          %478 = sbr.rel (%p476) target = $region28
        $region27: #{tpu_custom_call.1} parent=19 // pred_region
          %p479 = scmp.lt.s32.totalorder %s31, 1
          %s480 = scalar_select %p479, %s31, 1
          %s481 = smul.addr %s480, 8
          %s482 = scalar_lea.vmem %s2, %s481
        $region28: #{tpu_custom_call.1} parent=19 // pred_fallthru
          _
        // Predicated region
        $region29: #{tpu_custom_call.1} parent=19 // pred_check
          %p483 = pneg %p129
        $region30: #{tpu_custom_call.1} parent=19 // pred_check_branch
          %485 = sbr.rel (%p483) target = $region32
        $region31: #{tpu_custom_call.1} parent=19 // pred_region
          %p486 = scmp.lt.s32.totalorder %s32, 1
          %s487 = scalar_select %p486, %s32, 1
          %s488 = scalar_lea.vmem %s3, %s487
        $region32: #{tpu_custom_call.1} parent=19 // pred_fallthru
          _
        // Predicated region
        $region33: #{tpu_custom_call.1} parent=19 // pred_check
          %p489 = pneg %p155
        $region34: #{tpu_custom_call.1} parent=19 // pred_check_branch
          %491 = sbr.rel (%p489) target = $region36
        $region35: #{tpu_custom_call.1} parent=19 // pred_region
          %p492 = scmp.lt.s32.totalorder %s32, 1
          %s493 = scalar_select %p492, %s32, 1
          %s494 = scalar_lea.vmem %s4, %s493
        $region36: #{tpu_custom_call.1} parent=19 // pred_fallthru
          _
        // Predicated region
        $region37: #{tpu_custom_call.1} parent=19 // pred_check
          %p495 = pneg %p181
        $region38: #{tpu_custom_call.1} parent=19 // pred_check_branch
          %497 = sbr.rel (%p495) target = $region40
        $region39: #{tpu_custom_call.1} parent=19 // pred_region
          %p498 = scmp.lt.s32.totalorder %s32, 1
          %s499 = scalar_select %p498, %s32, 1
          %s500 = smul.addr %s499, 4
          %s501 = smul.addr %s500, 4
          %s502 = scalar_lea.vmem %s5, %s501
        $region40: #{tpu_custom_call.1} parent=19 // pred_fallthru
          _
        // Predicated region
        $region41: #{tpu_custom_call.1} parent=19 // pred_check
          %p503 = pneg %p207
        $region42: #{tpu_custom_call.1} parent=19 // pred_check_branch
          %505 = sbr.rel (%p503) target = $region44
        $region43: #{tpu_custom_call.1} parent=19 // pred_region
          %p506 = scmp.lt.s32.totalorder %s32, 1
          %s507 = scalar_select %p506, %s32, 1
          %s508 = scalar_lea.vmem %s6, %s507
        $region44: #{tpu_custom_call.1} parent=19 // pred_fallthru
          _
        // Predicated region
        $region45: #{tpu_custom_call.1} parent=19 // pred_check
          %p509 = pneg %p233
        $region46: #{tpu_custom_call.1} parent=19 // pred_check_branch
          %511 = sbr.rel (%p509) target = $region48
        $region47: #{tpu_custom_call.1} parent=19 // pred_region
          %p512 = scmp.lt.s32.totalorder %s32, 1
          %s513 = scalar_select %p512, %s32, 1
          %s514 = smul.addr %s513, 4
          %s515 = smul.addr %s514, 4
          %s516 = scalar_lea.vmem %s7, %s515
        $region48: #{tpu_custom_call.1} parent=19 // pred_fallthru
          _
        // Predicated region
        $region49: #{tpu_custom_call.1} parent=19 // pred_check
          %p517 = pneg %p259
        $region50: #{tpu_custom_call.1} parent=19 // pred_check_branch
          %519 = sbr.rel (%p517) target = $region52
        $region51: #{tpu_custom_call.1} parent=19 // pred_region
          %p520 = scmp.lt.s32.totalorder %s32, 1
          %s521 = scalar_select %p520, %s32, 1
          %s522 = scalar_lea.vmem %s8, %s521
        $region52: #{tpu_custom_call.1} parent=19 // pred_fallthru
          _
        // Predicated region
        $region53: #{tpu_custom_call.1} parent=19 // pred_check
          %p523 = pneg %p285
        $region54: #{tpu_custom_call.1} parent=19 // pred_check_branch
          %525 = sbr.rel (%p523) target = $region56
        $region55: #{tpu_custom_call.1} parent=19 // pred_region
          %p526 = scmp.lt.s32.totalorder %s32, 1
          %s527 = scalar_select %p526, %s32, 1
          %s528 = scalar_lea.vmem %s9, %s527
        $region56: #{tpu_custom_call.1} parent=19 // pred_fallthru
          _
        // Predicated region
        $region57: #{tpu_custom_call.1} parent=19 // pred_check
          %p529 = pneg %p311
        $region58: #{tpu_custom_call.1} parent=19 // pred_check_branch
          %531 = sbr.rel (%p529) target = $region60
        $region59: #{tpu_custom_call.1} parent=19 // pred_region
          %p532 = scmp.lt.s32.totalorder %s32, 1
          %s533 = scalar_select %p532, %s32, 1
          %s534 = scalar_lea.vmem %s10, %s533
        $region60: #{tpu_custom_call.1} parent=19 // pred_fallthru
          _
        // Predicated region
        $region61: #{tpu_custom_call.1} parent=19 // pred_check
          %p535 = pneg %p337
        $region62: #{tpu_custom_call.1} parent=19 // pred_check_branch
          %537 = sbr.rel (%p535) target = $region64
        $region63: #{tpu_custom_call.1} parent=19 // pred_region
          %p538 = scmp.lt.s32.totalorder %s32, 1
          %s539 = scalar_select %p538, %s32, 1
          %s540 = smul.addr %s539, 4
          %s541 = smul.addr %s540, 4
          %s542 = scalar_lea.vmem %s11, %s541
        $region64: #{tpu_custom_call.1} parent=19 // pred_fallthru
          _
        // Predicated region
        $region65: #{tpu_custom_call.1} parent=19 // pred_check
          %p543 = pneg %p363
        $region66: #{tpu_custom_call.1} parent=19 // pred_check_branch
          %545 = sbr.rel (%p543) target = $region68
        $region67: #{tpu_custom_call.1} parent=19 // pred_region
          %p546 = scmp.lt.s32.totalorder %s32, 1
          %s547 = scalar_select %p546, %s32, 1
          %s548 = scalar_lea.vmem %s12, %s547
        $region68: #{tpu_custom_call.1} parent=19 // pred_fallthru
          _
        // Predicated region
        $region69: #{tpu_custom_call.1} parent=19 // pred_check
          %p549 = pneg %p389
        $region70: #{tpu_custom_call.1} parent=19 // pred_check_branch
          %551 = sbr.rel (%p549) target = $region72
        $region71: #{tpu_custom_call.1} parent=19 // pred_region
          %p552 = scmp.lt.s32.totalorder %s32, 1
          %s553 = scalar_select %p552, %s32, 1
          %s554 = smul.addr %s553, 16
          %s555 = smul.addr %s554, 4
          %s556 = scalar_lea.vmem %s13, %s555
        $region72: #{tpu_custom_call.1} parent=19 // pred_fallthru
          _
        // Predicated region
        $region73: #{tpu_custom_call.1} parent=19 // pred_check
          %p557 = pneg %p415
        $region74: #{tpu_custom_call.1} parent=19 // pred_check_branch
          %559 = sbr.rel (%p557) target = $region76
        $region75: #{tpu_custom_call.1} parent=19 // pred_region
          %p560 = scmp.lt.s32.totalorder %s32, 1
          %s561 = scalar_select %p560, %s32, 1
          %s562 = scalar_lea.vmem %s14, %s561
        $region76: #{tpu_custom_call.1} parent=19 // pred_fallthru
          _
      $region20: #{tpu_custom_call.1} parent=5 // pred_fallthru
        _
      %p563 = scmp.le.s32.totalorder 1, %s24
      %p564 = scmp.lt.s32.totalorder %s24, 5
      %p565 = pnand %p563, %p564
      %p566 = pneg %p565
      // Predicated region
      $region77: #{tpu_custom_call.1} parent=5 // pred_check
        _
      $region78: #{tpu_custom_call.1} parent=5 // pred_check_branch
        %568 = sbr.rel (%p565) target = $region80
      $region79: #{tpu_custom_call.1} parent=5 // pred_region
        %s569 = ssub.s32 %s24, 1
        %p570 = scmp.lt.s32.totalorder %s33, 1
        %s571 = scalar_select %p570, %s33, 1
        %s572 = smul.addr %s571, 8
        %s573 = scalar_lea.vmem %s0, %s572
        %p574 = pneg %p62
        %p575 = pneg %p59
        %p576 = pneg %p83
        %p577 = pneg %p80
        %p578 = scmp.lt.s32.totalorder %s33, 1
        %s579 = scalar_select %p578, %s33, 1
        %s580 = smul.addr %s579, 8
        %s581 = scalar_lea.vmem %s2, %s580
        %p582 = pneg %p109
        %p583 = pneg %p106
        %p584 = scmp.lt.s32.totalorder %s34, 1
        %s585 = scalar_select %p584, %s34, 1
        %s586 = scalar_lea.vmem %s3, %s585
        %p587 = pneg %p135
        %p588 = pneg %p132
        %p589 = scmp.lt.s32.totalorder %s34, 1
        %s590 = scalar_select %p589, %s34, 1
        %s591 = scalar_lea.vmem %s4, %s590
        %p592 = pneg %p161
        %p593 = pneg %p158
        %p594 = scmp.lt.s32.totalorder %s34, 1
        %s595 = scalar_select %p594, %s34, 1
        %s596 = smul.addr %s595, 4
        %s597 = smul.addr %s596, 4
        %s598 = scalar_lea.vmem %s5, %s597
        %p599 = pneg %p187
        %p600 = pneg %p184
        %p601 = scmp.lt.s32.totalorder %s34, 1
        %s602 = scalar_select %p601, %s34, 1
        %s603 = scalar_lea.vmem %s6, %s602
        %p604 = pneg %p213
        %p605 = pneg %p210
        %p606 = scmp.lt.s32.totalorder %s34, 1
        %s607 = scalar_select %p606, %s34, 1
        %s608 = smul.addr %s607, 4
        %s609 = smul.addr %s608, 4
        %s610 = scalar_lea.vmem %s7, %s609
        %p611 = pneg %p239
        %p612 = pneg %p236
        %p613 = scmp.lt.s32.totalorder %s34, 1
        %s614 = scalar_select %p613, %s34, 1
        %s615 = scalar_lea.vmem %s8, %s614
        %p616 = pneg %p265
        %p617 = pneg %p262
        %p618 = scmp.lt.s32.totalorder %s34, 1
        %s619 = scalar_select %p618, %s34, 1
        %s620 = scalar_lea.vmem %s9, %s619
        %p621 = pneg %p291
        %p622 = pneg %p288
        %p623 = scmp.lt.s32.totalorder %s34, 1
        %s624 = scalar_select %p623, %s34, 1
        %s625 = scalar_lea.vmem %s10, %s624
        %p626 = pneg %p317
        %p627 = pneg %p314
        %p628 = scmp.lt.s32.totalorder %s34, 1
        %s629 = scalar_select %p628, %s34, 1
        %s630 = smul.addr %s629, 4
        %s631 = smul.addr %s630, 4
        %s632 = scalar_lea.vmem %s11, %s631
        %p633 = pneg %p343
        %p634 = pneg %p340
        %p635 = scmp.lt.s32.totalorder %s34, 1
        %s636 = scalar_select %p635, %s34, 1
        %s637 = scalar_lea.vmem %s12, %s636
        %p638 = pneg %p369
        %p639 = pneg %p366
        %p640 = scmp.lt.s32.totalorder %s34, 1
        %s641 = scalar_select %p640, %s34, 1
        %s642 = smul.addr %s641, 16
        %s643 = smul.addr %s642, 4
        %s644 = scalar_lea.vmem %s13, %s643
        %p645 = pneg %p395
        %p646 = pneg %p392
        %p647 = scmp.lt.s32.totalorder %s34, 1
        %s648 = scalar_select %p647, %s34, 1
        %s649 = scalar_lea.vmem %s14, %s648
        %p650 = pneg %p421
        %p651 = pneg %p418
        %p652 = pneg %p447
        %p653 = pneg %p444
        %s654 = sand.u32 %s434, 1
        %s655 = scalar_lea.sflag [#allocation4], %s654
        %s656 = sand.u32 %s434, 1
        %s657 = smul.addr %s656, 8
        %s658 = scalar_lea.vmem [#allocation3], %s657
        %p659 = scmp.lt.s32.totalorder %s33, 1
        %s660 = scalar_select %p659, %s33, 1
        %s661 = smul.addr %s660, 8
        %s662 = scalar_lea.vmem %s0, %s661
        %p663 = scmp.lt.s32.totalorder %s33, 1
        %s664 = scalar_select %p663, %s33, 1
        %s665 = smul.addr %s664, 8
        %s666 = scalar_lea.vmem %s2, %s665
        %p667 = scmp.lt.s32.totalorder %s34, 1
        %s668 = scalar_select %p667, %s34, 1
        %s669 = scalar_lea.vmem %s3, %s668
        %p670 = scmp.lt.s32.totalorder %s34, 1
        %s671 = scalar_select %p670, %s34, 1
        %s672 = scalar_lea.vmem %s4, %s671
        %p673 = scmp.lt.s32.totalorder %s34, 1
        %s674 = scalar_select %p673, %s34, 1
        %s675 = smul.addr %s674, 4
        %s676 = smul.addr %s675, 4
        %s677 = scalar_lea.vmem %s5, %s676
        %p678 = scmp.lt.s32.totalorder %s34, 1
        %s679 = scalar_select %p678, %s34, 1
        %s680 = scalar_lea.vmem %s6, %s679
        %p681 = scmp.lt.s32.totalorder %s34, 1
        %s682 = scalar_select %p681, %s34, 1
        %s683 = smul.addr %s682, 4
        %s684 = smul.addr %s683, 4
        %s685 = scalar_lea.vmem %s7, %s684
        %p686 = scmp.lt.s32.totalorder %s34, 1
        %s687 = scalar_select %p686, %s34, 1
        %s688 = scalar_lea.vmem %s8, %s687
        %p689 = scmp.lt.s32.totalorder %s34, 1
        %s690 = scalar_select %p689, %s34, 1
        %s691 = scalar_lea.vmem %s9, %s690
        %p692 = scmp.lt.s32.totalorder %s34, 1
        %s693 = scalar_select %p692, %s34, 1
        %s694 = scalar_lea.vmem %s10, %s693
        %p695 = scmp.lt.s32.totalorder %s34, 1
        %s696 = scalar_select %p695, %s34, 1
        %s697 = smul.addr %s696, 4
        %s698 = smul.addr %s697, 4
        %s699 = scalar_lea.vmem %s11, %s698
        %p700 = scmp.lt.s32.totalorder %s34, 1
        %s701 = scalar_select %p700, %s34, 1
        %s702 = scalar_lea.vmem %s12, %s701
        %p703 = scmp.lt.s32.totalorder %s34, 1
        %s704 = scalar_select %p703, %s34, 1
        %s705 = smul.addr %s704, 16
        %s706 = smul.addr %s705, 4
        %s707 = scalar_lea.vmem %s13, %s706
        %p708 = scmp.lt.s32.totalorder %s34, 1
        %s709 = scalar_select %p708, %s34, 1
        %s710 = scalar_lea.vmem %s14, %s709
        %p712 = scmp.eq.s32.totalorder %s34, 0
        // Predicated region
        $region81: #{tpu_custom_call.1} parent=79 // pred_check
          %p713 = pneg %p712
        $region82: #{tpu_custom_call.1} parent=79 // pred_check_branch
          %715 = sbr.rel (%p713) target = $region84
        $region83: #{tpu_custom_call.1} parent=79 // pred_region
          %v716 = vld [vmem:[%s662] sm:$0xff]
          %v717 = vld [vmem:[%s1] sm:$0xff]
          %v718 = vadd.f32 %v716, %v717
          %vm719 = vcmask 261120
          %720 = vst.msk [vmem:[#allocation2] sm:$0xff] %vm719, %v718
        $region84: #{tpu_custom_call.1} parent=79 // pred_fallthru
          _
        %v721 = vld [vmem:[#allocation2] sm:$0xff]
        %v722 = vld [vmem:[%s669] sm:$0x1]
        %v723 = vld [vmem:[%s672] sm:$0x1]
        %vm724 = vcmask 261120
        %v725 = vsel %vm724, %v721, 0.0
        %726 = vadd.xlane.f32.xlu0 %v725
        %v727 = vpop.xlane.xlu0 %726
        %v728 = vrcp.pop 32.0
        %v729 = vmul.f32 %v727, %v728
        %v730 = vsub.f32 %v721, %v729
        %v731 = vmul.f32 %v730, %v730
        %v732 = vsel %vm724, %v731, 0.0
        %733 = vadd.xlane.f32.xlu0 %v732
        %v734 = vpop.xlane.xlu0 %733
        %v735 = vmul.f32 %v734, %v728
        %v736 = vadd.f32 %v735, 1e-05
        %v737 = vrsqrt.pop %v736
        %v738 = vmul.f32 %v730, %v737
        %v740 = vlaneseq
        %v741 = vshrl.u32 %v740, 7
        %v742 = vsub.s32 0, %v741
        %v743 = vrot.slane %v722, %v742
        %v745 = vmul.f32 %v738, %v743
        %v747 = vlaneseq
        %v748 = vshrl.u32 %v747, 7
        %v749 = vsub.s32 0, %v748
        %v750 = vrot.slane %v723, %v749
        %v752 = vadd.f32 %v745, %v750
        %v753 = vpack.c.bf16 %v752, %v752
        %v754 = vld [vmem:[%s677] sm:$0xf]
        %v755 = vld [vmem:[%s677 + $0x4] sm:$0xf]
        %v756 = vld [vmem:[%s677 + $0x8] sm:$0xf]
        %v757 = vld [vmem:[%s677 + $0xc] sm:$0xf]
        %v758 = vld [vmem:[%s680] sm:$0x1]
        %v760 = vlaneseq
        %v761 = vshrl.u32 %v760, 7
        %v762 = vsub.s32 0, %v761
        %v763 = vrot.slane %v758, %v762
        %v769 = vunpack.c.l.b16 %v754
        %v770 = vunpack.c.l.b16 %v755
        %v771 = vunpack.c.l.b16 %v756
        %v772 = vunpack.c.l.b16 %v757
        %v773 = vpack.c.b16 %v770, %v769
        %v774 = vpack.c.b16 %v772, %v771
        %v778 = vsel %vm724, %v753, 0
        %780 = vmatprep.subr.bf16.mxu0 0
        %781 = vmatpush1.bf16.msra.mxu0 %v773
        %782 = vmatprep.subr.bf16.mxu0 0
        %783 = vmatpush1.bf16.msra.mxu0 %v774
        %784 = vmatprep.subr.bf16.mxu0 0
        %785 = vmatpush1.bf16.msra.mxu0 0
        %786 = vmatprep.subr.bf16.mxu0 0
        %787 = vmatpush1.bf16.msra.mxu0 0
        %788 = vmatprep.subr.bf16.mxu0 0
        %789 = vmatpush1.bf16.msra.mxu0 0
        %790 = vmatprep.subr.bf16.mxu0 0
        %791 = vmatpush1.bf16.msra.mxu0 0
        %792 = vmatprep.subr.bf16.mxu0 0
        %793 = vmatpush1.bf16.msra.mxu0 0
        %794 = vmatprep.subr.bf16.mxu0 0
        %795 = vmatpush1.bf16.msra.mxu0 0
        %796 = vmatprep.subr.bf16.mxu0 0
        %797 = vmatpush1.bf16.msra.mxu0 0
        %798 = vmatprep.subr.bf16.mxu0 0
        %799 = vmatpush1.bf16.msra.mxu0 0
        %800 = vmatprep.subr.bf16.mxu0 0
        %801 = vmatpush1.bf16.msra.mxu0 0
        %802 = vmatprep.subr.bf16.mxu0 0
        %803 = vmatpush1.bf16.msra.mxu0 0
        %804 = vmatprep.subr.bf16.mxu0 0
        %805 = vmatpush1.bf16.msra.mxu0 0
        %806 = vmatprep.subr.bf16.mxu0 0
        %807 = vmatpush1.bf16.msra.mxu0 0
        %808 = vmatprep.subr.bf16.mxu0 0
        %809 = vmatpush1.bf16.msra.mxu0 0
        %810 = vmatprep.subr.bf16.mxu0 0
        %811 = vmatpush1.bf16.msra.mxu0 0
        %812 = vmatprep.mubr.bf16.mxu0 0
        %813 = vmatmul.mubr.bf16.gmra.mrb[0].mxu0 %v778
        %v814 = vpop.f32.mrb[0].mxu0
        %v815 = vadd.f32 %v763, %v814
        %v816 = vpop.f32.mrb[0].mxu0
        %v817 = vpop.f32.mrb[0].mxu0
        %v818 = vpop.f32.mrb[0].mxu0
        %819 = vdwg.mxu0
        %821 = vrot.lane.b32.xlu0 %v815, 120
        %v822 = vpop.permute.xlu0 %821
        %824 = vrot.lane.b32.xlu0 %v815, 112
        %v825 = vpop.permute.xlu0 %824
        %827 = vrot.lane.b32.xlu0 %v815, 104
        %v828 = vpop.permute.xlu0 %827
        %v830 = vcombine.low %v815, %v825
        %v831 = vcombine.high %v815, %v825
        %v833 = vunpack.c.l.s4 1983009808
        %v834 = vunpack.c.0.s8 %v833
        %v835 = vlaneseq
        %v836 = vshrl.u32 %v835, 7
        %v837 = vsub.s32 %v834, %v836
        %v838 = vrot.slane %v830, %v837
        %v840 = vunpack.c.l.s4 1983009808
        %v841 = vunpack.c.0.s8 %v840
        %v842 = vlaneseq
        %v843 = vshrl.u32 %v842, 7
        %v844 = vsub.s32 %v841, %v843
        %v845 = vrot.slane %v831, %v844
        %v846 = vcombine.low %v822, %v828
        %v847 = vcombine.high %v822, %v828
        %v849 = vunpack.c.l.s4 1983009808
        %v850 = vunpack.c.0.s8 %v849
        %v851 = vlaneseq
        %v852 = vshrl.u32 %v851, 7
        %v853 = vsub.s32 %v850, %v852
        %v854 = vrot.slane %v846, %v853
        %v856 = vunpack.c.l.s4 1983009808
        %v857 = vunpack.c.0.s8 %v856
        %v858 = vlaneseq
        %v859 = vshrl.u32 %v858, 7
        %v860 = vsub.s32 %v857, %v859
        %v861 = vrot.slane %v847, %v860
        %v862 = vcombine.low %v838, %v854
        %v863 = vcombine.high %v838, %v854
        %v865 = vunpack.c.l.s4 1934713408
        %v866 = vunpack.c.0.s8 %v865
        %v867 = vlaneseq
        %v868 = vshrl.u32 %v867, 7
        %v869 = vsub.s32 %v866, %v868
        %v870 = vrot.slane %v862, %v869
        %v872 = vunpack.c.l.s4 1934713408
        %v873 = vunpack.c.0.s8 %v872
        %v874 = vlaneseq
        %v875 = vshrl.u32 %v874, 7
        %v876 = vsub.s32 %v873, %v875
        %v877 = vrot.slane %v863, %v876
        %v878 = vcombine.low %v845, %v861
        %v879 = vcombine.high %v845, %v861
        %v881 = vunpack.c.l.s4 1934713408
        %v882 = vunpack.c.0.s8 %v881
        %v883 = vlaneseq
        %v884 = vshrl.u32 %v883, 7
        %v885 = vsub.s32 %v882, %v884
        %v886 = vrot.slane %v878, %v885
        %v888 = vunpack.c.l.s4 1934713408
        %v889 = vunpack.c.0.s8 %v888
        %v890 = vlaneseq
        %v891 = vshrl.u32 %v890, 7
        %v892 = vsub.s32 %v889, %v891
        %v893 = vrot.slane %v879, %v892
        %v894 = vcombine.high %v870, 0.0
        %v895 = vcombine.high %v877, 0.0
        %v896 = vcombine.high %v886, 0.0
        %v897 = vcombine.high %v893, 0.0
        %v898 = vcombine.low %v870, %v877
        %v900 = vunpack.c.l.s4 1983009808
        %v901 = vunpack.c.0.s8 %v900
        %v902 = vlaneseq
        %v903 = vshrl.u32 %v902, 7
        %v904 = vsub.s32 %v901, %v903
        %v905 = vrot.slane %v898, %v904
        %v906 = vcombine.low %v894, %v895
        %v908 = vunpack.c.l.s4 1983009808
        %v909 = vunpack.c.0.s8 %v908
        %v910 = vlaneseq
        %v911 = vshrl.u32 %v910, 7
        %v912 = vsub.s32 %v909, %v911
        %v913 = vrot.slane %v906, %v912
        %v914 = vcombine.low %v886, %v893
        %v916 = vunpack.c.l.s4 1983009808
        %v917 = vunpack.c.0.s8 %v916
        %v918 = vlaneseq
        %v919 = vshrl.u32 %v918, 7
        %v920 = vsub.s32 %v917, %v919
        %v921 = vrot.slane %v914, %v920
        %v922 = vcombine.low %v896, %v897
        %v924 = vunpack.c.l.s4 1983009808
        %v925 = vunpack.c.0.s8 %v924
        %v926 = vlaneseq
        %v927 = vshrl.u32 %v926, 7
        %v928 = vsub.s32 %v925, %v927
        %v929 = vrot.slane %v922, %v928
        %v930 = vcombine.low %v905, %v913
        %v931 = vcombine.high %v905, %v913
        %v933 = vunpack.c.l.s4 1934713408
        %v934 = vunpack.c.0.s8 %v933
        %v935 = vlaneseq
        %v936 = vshrl.u32 %v935, 7
        %v937 = vsub.s32 %v934, %v936
        %v938 = vrot.slane %v930, %v937
        %v940 = vunpack.c.l.s4 1934713408
        %v941 = vunpack.c.0.s8 %v940
        %v942 = vlaneseq
        %v943 = vshrl.u32 %v942, 7
        %v944 = vsub.s32 %v941, %v943
        %v945 = vrot.slane %v931, %v944
        %v946 = vcombine.low %v921, %v929
        %v947 = vcombine.high %v921, %v929
        %v949 = vunpack.c.l.s4 1934713408
        %v950 = vunpack.c.0.s8 %v949
        %v951 = vlaneseq
        %v952 = vshrl.u32 %v951, 7
        %v953 = vsub.s32 %v950, %v952
        %v954 = vrot.slane %v946, %v953
        %v956 = vunpack.c.l.s4 1934713408
        %v957 = vunpack.c.0.s8 %v956
        %v958 = vlaneseq
        %v959 = vshrl.u32 %v958, 7
        %v960 = vsub.s32 %v957, %v959
        %v961 = vrot.slane %v947, %v960
        %v962 = vcombine.low %v938, %v954
        %v963 = vcombine.high %v938, %v954
        %v964 = vcombine.low %v945, %v961
        %v965 = vcombine.high %v945, %v961
        %966 = vrot.lane.b32.xlu0 %v815, 96
        %v967 = vpop.permute.xlu0 %966
        %968 = vrot.lane.b32.xlu0 %v822, 96
        %v969 = vpop.permute.xlu0 %968
        %970 = vrot.lane.b32.xlu0 %v825, 96
        %v971 = vpop.permute.xlu0 %970
        %972 = vrot.lane.b32.xlu0 %v828, 96
        %v973 = vpop.permute.xlu0 %972
        %v978 = vcombine.low %v967, %v971
        %v979 = vcombine.high %v967, %v971
        %v981 = vunpack.c.l.s4 1983009808
        %v982 = vunpack.c.0.s8 %v981
        %v983 = vlaneseq
        %v984 = vshrl.u32 %v983, 7
        %v985 = vsub.s32 %v982, %v984
        %v986 = vrot.slane %v978, %v985
        %v988 = vunpack.c.l.s4 1983009808
        %v989 = vunpack.c.0.s8 %v988
        %v990 = vlaneseq
        %v991 = vshrl.u32 %v990, 7
        %v992 = vsub.s32 %v989, %v991
        %v993 = vrot.slane %v979, %v992
        %v994 = vcombine.low %v969, %v973
        %v995 = vcombine.high %v969, %v973
        %v997 = vunpack.c.l.s4 1983009808
        %v998 = vunpack.c.0.s8 %v997
        %v999 = vlaneseq
        %v1000 = vshrl.u32 %v999, 7
        %v1001 = vsub.s32 %v998, %v1000
        %v1002 = vrot.slane %v994, %v1001
        %v1004 = vunpack.c.l.s4 1983009808
        %v1005 = vunpack.c.0.s8 %v1004
        %v1006 = vlaneseq
        %v1007 = vshrl.u32 %v1006, 7
        %v1008 = vsub.s32 %v1005, %v1007
        %v1009 = vrot.slane %v995, %v1008
        %v1010 = vcombine.low %v986, %v1002
        %v1011 = vcombine.high %v986, %v1002
        %v1013 = vunpack.c.l.s4 1934713408
        %v1014 = vunpack.c.0.s8 %v1013
        %v1015 = vlaneseq
        %v1016 = vshrl.u32 %v1015, 7
        %v1017 = vsub.s32 %v1014, %v1016
        %v1018 = vrot.slane %v1010, %v1017
        %v1020 = vunpack.c.l.s4 1934713408
        %v1021 = vunpack.c.0.s8 %v1020
        %v1022 = vlaneseq
        %v1023 = vshrl.u32 %v1022, 7
        %v1024 = vsub.s32 %v1021, %v1023
        %v1025 = vrot.slane %v1011, %v1024
        %v1026 = vcombine.low %v993, %v1009
        %v1027 = vcombine.high %v993, %v1009
        %v1029 = vunpack.c.l.s4 1934713408
        %v1030 = vunpack.c.0.s8 %v1029
        %v1031 = vlaneseq
        %v1032 = vshrl.u32 %v1031, 7
        %v1033 = vsub.s32 %v1030, %v1032
        %v1034 = vrot.slane %v1026, %v1033
        %v1036 = vunpack.c.l.s4 1934713408
        %v1037 = vunpack.c.0.s8 %v1036
        %v1038 = vlaneseq
        %v1039 = vshrl.u32 %v1038, 7
        %v1040 = vsub.s32 %v1037, %v1039
        %v1041 = vrot.slane %v1027, %v1040
        %v1042 = vcombine.high %v1018, 0.0
        %v1043 = vcombine.high %v1025, 0.0
        %v1044 = vcombine.high %v1034, 0.0
        %v1045 = vcombine.high %v1041, 0.0
        %v1046 = vcombine.low %v1018, %v1025
        %v1048 = vunpack.c.l.s4 1983009808
        %v1049 = vunpack.c.0.s8 %v1048
        %v1050 = vlaneseq
        %v1051 = vshrl.u32 %v1050, 7
        %v1052 = vsub.s32 %v1049, %v1051
        %v1053 = vrot.slane %v1046, %v1052
        %v1054 = vcombine.low %v1042, %v1043
        %v1056 = vunpack.c.l.s4 1983009808
        %v1057 = vunpack.c.0.s8 %v1056
        %v1058 = vlaneseq
        %v1059 = vshrl.u32 %v1058, 7
        %v1060 = vsub.s32 %v1057, %v1059
        %v1061 = vrot.slane %v1054, %v1060
        %v1062 = vcombine.low %v1034, %v1041
        %v1064 = vunpack.c.l.s4 1983009808
        %v1065 = vunpack.c.0.s8 %v1064
        %v1066 = vlaneseq
        %v1067 = vshrl.u32 %v1066, 7
        %v1068 = vsub.s32 %v1065, %v1067
        %v1069 = vrot.slane %v1062, %v1068
        %v1070 = vcombine.low %v1044, %v1045
        %v1072 = vunpack.c.l.s4 1983009808
        %v1073 = vunpack.c.0.s8 %v1072
        %v1074 = vlaneseq
        %v1075 = vshrl.u32 %v1074, 7
        %v1076 = vsub.s32 %v1073, %v1075
        %v1077 = vrot.slane %v1070, %v1076
        %v1078 = vcombine.low %v1053, %v1061
        %v1079 = vcombine.high %v1053, %v1061
        %v1081 = vunpack.c.l.s4 1934713408
        %v1082 = vunpack.c.0.s8 %v1081
        %v1083 = vlaneseq
        %v1084 = vshrl.u32 %v1083, 7
        %v1085 = vsub.s32 %v1082, %v1084
        %v1086 = vrot.slane %v1078, %v1085
        %v1088 = vunpack.c.l.s4 1934713408
        %v1089 = vunpack.c.0.s8 %v1088
        %v1090 = vlaneseq
        %v1091 = vshrl.u32 %v1090, 7
        %v1092 = vsub.s32 %v1089, %v1091
        %v1093 = vrot.slane %v1079, %v1092
        %v1094 = vcombine.low %v1069, %v1077
        %v1095 = vcombine.high %v1069, %v1077
        %v1097 = vunpack.c.l.s4 1934713408
        %v1098 = vunpack.c.0.s8 %v1097
        %v1099 = vlaneseq
        %v1100 = vshrl.u32 %v1099, 7
        %v1101 = vsub.s32 %v1098, %v1100
        %v1102 = vrot.slane %v1094, %v1101
        %v1104 = vunpack.c.l.s4 1934713408
        %v1105 = vunpack.c.0.s8 %v1104
        %v1106 = vlaneseq
        %v1107 = vshrl.u32 %v1106, 7
        %v1108 = vsub.s32 %v1105, %v1107
        %v1109 = vrot.slane %v1095, %v1108
        %v1110 = vcombine.low %v1086, %v1102
        %v1111 = vcombine.high %v1086, %v1102
        %v1112 = vcombine.low %v1093, %v1109
        %v1113 = vcombine.high %v1093, %v1109
        %1114 = vrot.lane.b32.xlu0 %v815, 64
        %v1115 = vpop.permute.xlu0 %1114
        %1116 = vrot.lane.b32.xlu0 %v822, 64
        %v1117 = vpop.permute.xlu0 %1116
        %1118 = vrot.lane.b32.xlu0 %v825, 64
        %v1119 = vpop.permute.xlu0 %1118
        %1120 = vrot.lane.b32.xlu0 %v828, 64
        %v1121 = vpop.permute.xlu0 %1120
        %v1126 = vcombine.low %v1115, %v1119
        %v1127 = vcombine.high %v1115, %v1119
        %v1129 = vunpack.c.l.s4 1983009808
        %v1130 = vunpack.c.0.s8 %v1129
        %v1131 = vlaneseq
        %v1132 = vshrl.u32 %v1131, 7
        %v1133 = vsub.s32 %v1130, %v1132
        %v1134 = vrot.slane %v1126, %v1133
        %v1136 = vunpack.c.l.s4 1983009808
        %v1137 = vunpack.c.0.s8 %v1136
        %v1138 = vlaneseq
        %v1139 = vshrl.u32 %v1138, 7
        %v1140 = vsub.s32 %v1137, %v1139
        %v1141 = vrot.slane %v1127, %v1140
        %v1142 = vcombine.low %v1117, %v1121
        %v1143 = vcombine.high %v1117, %v1121
        %v1145 = vunpack.c.l.s4 1983009808
        %v1146 = vunpack.c.0.s8 %v1145
        %v1147 = vlaneseq
        %v1148 = vshrl.u32 %v1147, 7
        %v1149 = vsub.s32 %v1146, %v1148
        %v1150 = vrot.slane %v1142, %v1149
        %v1152 = vunpack.c.l.s4 1983009808
        %v1153 = vunpack.c.0.s8 %v1152
        %v1154 = vlaneseq
        %v1155 = vshrl.u32 %v1154, 7
        %v1156 = vsub.s32 %v1153, %v1155
        %v1157 = vrot.slane %v1143, %v1156
        %v1158 = vcombine.low %v1134, %v1150
        %v1159 = vcombine.high %v1134, %v1150
        %v1161 = vunpack.c.l.s4 1934713408
        %v1162 = vunpack.c.0.s8 %v1161
        %v1163 = vlaneseq
        %v1164 = vshrl.u32 %v1163, 7
        %v1165 = vsub.s32 %v1162, %v1164
        %v1166 = vrot.slane %v1158, %v1165
        %v1168 = vunpack.c.l.s4 1934713408
        %v1169 = vunpack.c.0.s8 %v1168
        %v1170 = vlaneseq
        %v1171 = vshrl.u32 %v1170, 7
        %v1172 = vsub.s32 %v1169, %v1171
        %v1173 = vrot.slane %v1159, %v1172
        %v1174 = vcombine.low %v1141, %v1157
        %v1175 = vcombine.high %v1141, %v1157
        %v1177 = vunpack.c.l.s4 1934713408
        %v1178 = vunpack.c.0.s8 %v1177
        %v1179 = vlaneseq
        %v1180 = vshrl.u32 %v1179, 7
        %v1181 = vsub.s32 %v1178, %v1180
        %v1182 = vrot.slane %v1174, %v1181
        %v1184 = vunpack.c.l.s4 1934713408
        %v1185 = vunpack.c.0.s8 %v1184
        %v1186 = vlaneseq
        %v1187 = vshrl.u32 %v1186, 7
        %v1188 = vsub.s32 %v1185, %v1187
        %v1189 = vrot.slane %v1175, %v1188
        %v1190 = vcombine.high %v1166, 0.0
        %v1191 = vcombine.high %v1173, 0.0
        %v1192 = vcombine.high %v1182, 0.0
        %v1193 = vcombine.high %v1189, 0.0
        %v1194 = vcombine.low %v1166, %v1173
        %v1196 = vunpack.c.l.s4 1983009808
        %v1197 = vunpack.c.0.s8 %v1196
        %v1198 = vlaneseq
        %v1199 = vshrl.u32 %v1198, 7
        %v1200 = vsub.s32 %v1197, %v1199
        %v1201 = vrot.slane %v1194, %v1200
        %v1202 = vcombine.low %v1190, %v1191
        %v1204 = vunpack.c.l.s4 1983009808
        %v1205 = vunpack.c.0.s8 %v1204
        %v1206 = vlaneseq
        %v1207 = vshrl.u32 %v1206, 7
        %v1208 = vsub.s32 %v1205, %v1207
        %v1209 = vrot.slane %v1202, %v1208
        %v1210 = vcombine.low %v1182, %v1189
        %v1212 = vunpack.c.l.s4 1983009808
        %v1213 = vunpack.c.0.s8 %v1212
        %v1214 = vlaneseq
        %v1215 = vshrl.u32 %v1214, 7
        %v1216 = vsub.s32 %v1213, %v1215
        %v1217 = vrot.slane %v1210, %v1216
        %v1218 = vcombine.low %v1192, %v1193
        %v1220 = vunpack.c.l.s4 1983009808
        %v1221 = vunpack.c.0.s8 %v1220
        %v1222 = vlaneseq
        %v1223 = vshrl.u32 %v1222, 7
        %v1224 = vsub.s32 %v1221, %v1223
        %v1225 = vrot.slane %v1218, %v1224
        %v1226 = vcombine.low %v1201, %v1209
        %v1227 = vcombine.high %v1201, %v1209
        %v1229 = vunpack.c.l.s4 1934713408
        %v1230 = vunpack.c.0.s8 %v1229
        %v1231 = vlaneseq
        %v1232 = vshrl.u32 %v1231, 7
        %v1233 = vsub.s32 %v1230, %v1232
        %v1234 = vrot.slane %v1226, %v1233
        %v1236 = vunpack.c.l.s4 1934713408
        %v1237 = vunpack.c.0.s8 %v1236
        %v1238 = vlaneseq
        %v1239 = vshrl.u32 %v1238, 7
        %v1240 = vsub.s32 %v1237, %v1239
        %v1241 = vrot.slane %v1227, %v1240
        %v1242 = vcombine.low %v1217, %v1225
        %v1243 = vcombine.high %v1217, %v1225
        %v1245 = vunpack.c.l.s4 1934713408
        %v1246 = vunpack.c.0.s8 %v1245
        %v1247 = vlaneseq
        %v1248 = vshrl.u32 %v1247, 7
        %v1249 = vsub.s32 %v1246, %v1248
        %v1250 = vrot.slane %v1242, %v1249
        %v1252 = vunpack.c.l.s4 1934713408
        %v1253 = vunpack.c.0.s8 %v1252
        %v1254 = vlaneseq
        %v1255 = vshrl.u32 %v1254, 7
        %v1256 = vsub.s32 %v1253, %v1255
        %v1257 = vrot.slane %v1243, %v1256
        %v1258 = vcombine.low %v1234, %v1250
        %v1259 = vcombine.high %v1234, %v1250
        %v1260 = vcombine.low %v1241, %v1257
        %v1261 = vcombine.high %v1241, %v1257
        %v1262 = vld [vmem:[%s666] sm:$0xff]
        %vm1263 = vcmask 64512
        %v1265 = vsel %vm1263, %v962, 0
        %v1268 = vsel %vm1263, %v1110, 0
        %1270 = vmatprep.subr.mxu0 0.0
        %1271 = vmatpush1.xpose.msra.mxu0 %v1268
        %1272 = vmatprep.subr.mxu0 0.0
        %1273 = vmatpush1.xpose.msra.mxu0 0.0
        %1274 = vmatprep.subr.mxu0 0.0
        %1275 = vmatpush1.xpose.msra.mxu0 0.0
        %1276 = vmatprep.subr.mxu0 0.0
        %1277 = vmatpush1.xpose.msra.mxu0 0.0
        %1278 = vmatprep.subr.mxu0 0.0
        %1279 = vmatpush1.xpose.msra.mxu0 0.0
        %1280 = vmatprep.subr.mxu0 0.0
        %1281 = vmatpush1.xpose.msra.mxu0 0.0
        %1282 = vmatprep.subr.mxu0 0.0
        %1283 = vmatpush1.xpose.msra.mxu0 0.0
        %1284 = vmatprep.subr.mxu0 0.0
        %1285 = vmatpush1.xpose.msra.mxu0 0.0
        %1286 = vmatprep.subr.mxu0 0.0
        %1287 = vmatpush1.xpose.msra.mxu0 0.0
        %1288 = vmatprep.subr.mxu0 0.0
        %1289 = vmatpush1.xpose.msra.mxu0 0.0
        %1290 = vmatprep.subr.mxu0 0.0
        %1291 = vmatpush1.xpose.msra.mxu0 0.0
        %1292 = vmatprep.subr.mxu0 0.0
        %1293 = vmatpush1.xpose.msra.mxu0 0.0
        %1294 = vmatprep.subr.mxu0 0.0
        %1295 = vmatpush1.xpose.msra.mxu0 0.0
        %1296 = vmatprep.subr.mxu0 0.0
        %1297 = vmatpush1.xpose.msra.mxu0 0.0
        %1298 = vmatprep.subr.mxu0 0.0
        %1299 = vmatpush1.xpose.msra.mxu0 0.0
        %1300 = vmatprep.subr.mxu0 0.0
        %1301 = vmatpush1.xpose.msra.mxu0 0.0
        %1302 = vmatprep.subr.mxu0 0.0
        %1303 = vmatpush1.xpose.msra.mxu0 0.0
        %1304 = vmatprep.subr.mxu0 0.0
        %1305 = vmatpush1.xpose.msra.mxu0 0.0
        %1306 = vmatprep.subr.mxu0 0.0
        %1307 = vmatpush1.xpose.msra.mxu0 0.0
        %1308 = vmatprep.subr.mxu0 0.0
        %1309 = vmatpush1.xpose.msra.mxu0 0.0
        %1310 = vmatprep.subr.mxu0 0.0
        %1311 = vmatpush1.xpose.msra.mxu0 0.0
        %1312 = vmatprep.subr.mxu0 0.0
        %1313 = vmatpush1.xpose.msra.mxu0 0.0
        %1314 = vmatprep.subr.mxu0 0.0
        %1315 = vmatpush1.xpose.msra.mxu0 0.0
        %1316 = vmatprep.subr.mxu0 0.0
        %1317 = vmatpush1.xpose.msra.mxu0 0.0
        %1318 = vmatprep.subr.mxu0 0.0
        %1319 = vmatpush1.xpose.msra.mxu0 0.0
        %1320 = vmatprep.subr.mxu0 0.0
        %1321 = vmatpush1.xpose.msra.mxu0 0.0
        %1322 = vmatprep.subr.mxu0 0.0
        %1323 = vmatpush1.xpose.msra.mxu0 0.0
        %1324 = vmatprep.subr.mxu0 0.0
        %1325 = vmatpush1.xpose.msra.mxu0 0.0
        %1326 = vmatprep.subr.mxu0 0.0
        %1327 = vmatpush1.xpose.msra.mxu0 0.0
        %1328 = vmatprep.subr.mxu0 0.0
        %1329 = vmatpush1.xpose.msra.mxu0 0.0
        %1330 = vmatprep.subr.mxu0 0.0
        %1331 = vmatpush1.xpose.msra.mxu0 0.0
        %1332 = vmatprep.subr.mxu0 0.0
        %1333 = vmatpush1.xpose.msra.mxu0 0.0
        %1334 = vmatprep.mubr.f32.mxu0 0.0
        %1335 = vmatmul.mubr.f32.gmra.mrb[0].mxu0 %v1265
        %v1336 = vpop.f32.mrb[0].mxu0
        %v1337 = vadd.f32 %v1262, %v1336
        %v1338 = vpop.f32.mrb[0].mxu0
        %1339 = vdwg.mxu0
        %v1341 = vsel %vm1263, %v963, 0
        %v1344 = vsel %vm1263, %v1111, 0
        %1346 = vmatprep.subr.mxu0 0.0
        %1347 = vmatpush1.xpose.msra.mxu0 %v1344
        %1348 = vmatprep.subr.mxu0 0.0
        %1349 = vmatpush1.xpose.msra.mxu0 0.0
        %1350 = vmatprep.subr.mxu0 0.0
        %1351 = vmatpush1.xpose.msra.mxu0 0.0
        %1352 = vmatprep.subr.mxu0 0.0
        %1353 = vmatpush1.xpose.msra.mxu0 0.0
        %1354 = vmatprep.subr.mxu0 0.0
        %1355 = vmatpush1.xpose.msra.mxu0 0.0
        %1356 = vmatprep.subr.mxu0 0.0
        %1357 = vmatpush1.xpose.msra.mxu0 0.0
        %1358 = vmatprep.subr.mxu0 0.0
        %1359 = vmatpush1.xpose.msra.mxu0 0.0
        %1360 = vmatprep.subr.mxu0 0.0
        %1361 = vmatpush1.xpose.msra.mxu0 0.0
        %1362 = vmatprep.subr.mxu0 0.0
        %1363 = vmatpush1.xpose.msra.mxu0 0.0
        %1364 = vmatprep.subr.mxu0 0.0
        %1365 = vmatpush1.xpose.msra.mxu0 0.0
        %1366 = vmatprep.subr.mxu0 0.0
        %1367 = vmatpush1.xpose.msra.mxu0 0.0
        %1368 = vmatprep.subr.mxu0 0.0
        %1369 = vmatpush1.xpose.msra.mxu0 0.0
        %1370 = vmatprep.subr.mxu0 0.0
        %1371 = vmatpush1.xpose.msra.mxu0 0.0
        %1372 = vmatprep.subr.mxu0 0.0
        %1373 = vmatpush1.xpose.msra.mxu0 0.0
        %1374 = vmatprep.subr.mxu0 0.0
        %1375 = vmatpush1.xpose.msra.mxu0 0.0
        %1376 = vmatprep.subr.mxu0 0.0
        %1377 = vmatpush1.xpose.msra.mxu0 0.0
        %1378 = vmatprep.subr.mxu0 0.0
        %1379 = vmatpush1.xpose.msra.mxu0 0.0
        %1380 = vmatprep.subr.mxu0 0.0
        %1381 = vmatpush1.xpose.msra.mxu0 0.0
        %1382 = vmatprep.subr.mxu0 0.0
        %1383 = vmatpush1.xpose.msra.mxu0 0.0
        %1384 = vmatprep.subr.mxu0 0.0
        %1385 = vmatpush1.xpose.msra.mxu0 0.0
        %1386 = vmatprep.subr.mxu0 0.0
        %1387 = vmatpush1.xpose.msra.mxu0 0.0
        %1388 = vmatprep.subr.mxu0 0.0
        %1389 = vmatpush1.xpose.msra.mxu0 0.0
        %1390 = vmatprep.subr.mxu0 0.0
        %1391 = vmatpush1.xpose.msra.mxu0 0.0
        %1392 = vmatprep.subr.mxu0 0.0
        %1393 = vmatpush1.xpose.msra.mxu0 0.0
        %1394 = vmatprep.subr.mxu0 0.0
        %1395 = vmatpush1.xpose.msra.mxu0 0.0
        %1396 = vmatprep.subr.mxu0 0.0
        %1397 = vmatpush1.xpose.msra.mxu0 0.0
        %1398 = vmatprep.subr.mxu0 0.0
        %1399 = vmatpush1.xpose.msra.mxu0 0.0
        %1400 = vmatprep.subr.mxu0 0.0
        %1401 = vmatpush1.xpose.msra.mxu0 0.0
        %1402 = vmatprep.subr.mxu0 0.0
        %1403 = vmatpush1.xpose.msra.mxu0 0.0
        %1404 = vmatprep.subr.mxu0 0.0
        %1405 = vmatpush1.xpose.msra.mxu0 0.0
        %1406 = vmatprep.subr.mxu0 0.0
        %1407 = vmatpush1.xpose.msra.mxu0 0.0
        %1408 = vmatprep.subr.mxu0 0.0
        %1409 = vmatpush1.xpose.msra.mxu0 0.0
        %1410 = vmatprep.mubr.f32.mxu0 0.0
        %1411 = vmatmul.mubr.f32.gmra.mrb[0].mxu0 %v1341
        %v1412 = vpop.f32.mrb[0].mxu0
        %v1413 = vadd.f32 %v1262, %v1412
        %v1414 = vpop.f32.mrb[0].mxu0
        %1415 = vdwg.mxu0
        %v1417 = vsel %vm1263, %v964, 0
        %v1420 = vsel %vm1263, %v1112, 0
        %1422 = vmatprep.subr.mxu0 0.0
        %1423 = vmatpush1.xpose.msra.mxu0 %v1420
        %1424 = vmatprep.subr.mxu0 0.0
        %1425 = vmatpush1.xpose.msra.mxu0 0.0
        %1426 = vmatprep.subr.mxu0 0.0
        %1427 = vmatpush1.xpose.msra.mxu0 0.0
        %1428 = vmatprep.subr.mxu0 0.0
        %1429 = vmatpush1.xpose.msra.mxu0 0.0
        %1430 = vmatprep.subr.mxu0 0.0
        %1431 = vmatpush1.xpose.msra.mxu0 0.0
        %1432 = vmatprep.subr.mxu0 0.0
        %1433 = vmatpush1.xpose.msra.mxu0 0.0
        %1434 = vmatprep.subr.mxu0 0.0
        %1435 = vmatpush1.xpose.msra.mxu0 0.0
        %1436 = vmatprep.subr.mxu0 0.0
        %1437 = vmatpush1.xpose.msra.mxu0 0.0
        %1438 = vmatprep.subr.mxu0 0.0
        %1439 = vmatpush1.xpose.msra.mxu0 0.0
        %1440 = vmatprep.subr.mxu0 0.0
        %1441 = vmatpush1.xpose.msra.mxu0 0.0
        %1442 = vmatprep.subr.mxu0 0.0
        %1443 = vmatpush1.xpose.msra.mxu0 0.0
        %1444 = vmatprep.subr.mxu0 0.0
        %1445 = vmatpush1.xpose.msra.mxu0 0.0
        %1446 = vmatprep.subr.mxu0 0.0
        %1447 = vmatpush1.xpose.msra.mxu0 0.0
        %1448 = vmatprep.subr.mxu0 0.0
        %1449 = vmatpush1.xpose.msra.mxu0 0.0
        %1450 = vmatprep.subr.mxu0 0.0
        %1451 = vmatpush1.xpose.msra.mxu0 0.0
        %1452 = vmatprep.subr.mxu0 0.0
        %1453 = vmatpush1.xpose.msra.mxu0 0.0
        %1454 = vmatprep.subr.mxu0 0.0
        %1455 = vmatpush1.xpose.msra.mxu0 0.0
        %1456 = vmatprep.subr.mxu0 0.0
        %1457 = vmatpush1.xpose.msra.mxu0 0.0
        %1458 = vmatprep.subr.mxu0 0.0
        %1459 = vmatpush1.xpose.msra.mxu0 0.0
        %1460 = vmatprep.subr.mxu0 0.0
        %1461 = vmatpush1.xpose.msra.mxu0 0.0
        %1462 = vmatprep.subr.mxu0 0.0
        %1463 = vmatpush1.xpose.msra.mxu0 0.0
        %1464 = vmatprep.subr.mxu0 0.0
        %1465 = vmatpush1.xpose.msra.mxu0 0.0
        %1466 = vmatprep.subr.mxu0 0.0
        %1467 = vmatpush1.xpose.msra.mxu0 0.0
        %1468 = vmatprep.subr.mxu0 0.0
        %1469 = vmatpush1.xpose.msra.mxu0 0.0
        %1470 = vmatprep.subr.mxu0 0.0
        %1471 = vmatpush1.xpose.msra.mxu0 0.0
        %1472 = vmatprep.subr.mxu0 0.0
        %1473 = vmatpush1.xpose.msra.mxu0 0.0
        %1474 = vmatprep.subr.mxu0 0.0
        %1475 = vmatpush1.xpose.msra.mxu0 0.0
        %1476 = vmatprep.subr.mxu0 0.0
        %1477 = vmatpush1.xpose.msra.mxu0 0.0
        %1478 = vmatprep.subr.mxu0 0.0
        %1479 = vmatpush1.xpose.msra.mxu0 0.0
        %1480 = vmatprep.subr.mxu0 0.0
        %1481 = vmatpush1.xpose.msra.mxu0 0.0
        %1482 = vmatprep.subr.mxu0 0.0
        %1483 = vmatpush1.xpose.msra.mxu0 0.0
        %1484 = vmatprep.subr.mxu0 0.0
        %1485 = vmatpush1.xpose.msra.mxu0 0.0
        %1486 = vmatprep.mubr.f32.mxu0 0.0
        %1487 = vmatmul.mubr.f32.gmra.mrb[0].mxu0 %v1417
        %v1488 = vpop.f32.mrb[0].mxu0
        %v1489 = vadd.f32 %v1262, %v1488
        %v1490 = vpop.f32.mrb[0].mxu0
        %1491 = vdwg.mxu0
        %v1493 = vsel %vm1263, %v965, 0
        %v1496 = vsel %vm1263, %v1113, 0
        %1498 = vmatprep.subr.mxu0 0.0
        %1499 = vmatpush1.xpose.msra.mxu0 %v1496
        %1500 = vmatprep.subr.mxu0 0.0
        %1501 = vmatpush1.xpose.msra.mxu0 0.0
        %1502 = vmatprep.subr.mxu0 0.0
        %1503 = vmatpush1.xpose.msra.mxu0 0.0
        %1504 = vmatprep.subr.mxu0 0.0
        %1505 = vmatpush1.xpose.msra.mxu0 0.0
        %1506 = vmatprep.subr.mxu0 0.0
        %1507 = vmatpush1.xpose.msra.mxu0 0.0
        %1508 = vmatprep.subr.mxu0 0.0
        %1509 = vmatpush1.xpose.msra.mxu0 0.0
        %1510 = vmatprep.subr.mxu0 0.0
        %1511 = vmatpush1.xpose.msra.mxu0 0.0
        %1512 = vmatprep.subr.mxu0 0.0
        %1513 = vmatpush1.xpose.msra.mxu0 0.0
        %1514 = vmatprep.subr.mxu0 0.0
        %1515 = vmatpush1.xpose.msra.mxu0 0.0
        %1516 = vmatprep.subr.mxu0 0.0
        %1517 = vmatpush1.xpose.msra.mxu0 0.0
        %1518 = vmatprep.subr.mxu0 0.0
        %1519 = vmatpush1.xpose.msra.mxu0 0.0
        %1520 = vmatprep.subr.mxu0 0.0
        %1521 = vmatpush1.xpose.msra.mxu0 0.0
        %1522 = vmatprep.subr.mxu0 0.0
        %1523 = vmatpush1.xpose.msra.mxu0 0.0
        %1524 = vmatprep.subr.mxu0 0.0
        %1525 = vmatpush1.xpose.msra.mxu0 0.0
        %1526 = vmatprep.subr.mxu0 0.0
        %1527 = vmatpush1.xpose.msra.mxu0 0.0
        %1528 = vmatprep.subr.mxu0 0.0
        %1529 = vmatpush1.xpose.msra.mxu0 0.0
        %1530 = vmatprep.subr.mxu0 0.0
        %1531 = vmatpush1.xpose.msra.mxu0 0.0
        %1532 = vmatprep.subr.mxu0 0.0
        %1533 = vmatpush1.xpose.msra.mxu0 0.0
        %1534 = vmatprep.subr.mxu0 0.0
        %1535 = vmatpush1.xpose.msra.mxu0 0.0
        %1536 = vmatprep.subr.mxu0 0.0
        %1537 = vmatpush1.xpose.msra.mxu0 0.0
        %1538 = vmatprep.subr.mxu0 0.0
        %1539 = vmatpush1.xpose.msra.mxu0 0.0
        %1540 = vmatprep.subr.mxu0 0.0
        %1541 = vmatpush1.xpose.msra.mxu0 0.0
        %1542 = vmatprep.subr.mxu0 0.0
        %1543 = vmatpush1.xpose.msra.mxu0 0.0
        %1544 = vmatprep.subr.mxu0 0.0
        %1545 = vmatpush1.xpose.msra.mxu0 0.0
        %1546 = vmatprep.subr.mxu0 0.0
        %1547 = vmatpush1.xpose.msra.mxu0 0.0
        %1548 = vmatprep.subr.mxu0 0.0
        %1549 = vmatpush1.xpose.msra.mxu0 0.0
        %1550 = vmatprep.subr.mxu0 0.0
        %1551 = vmatpush1.xpose.msra.mxu0 0.0
        %1552 = vmatprep.subr.mxu0 0.0
        %1553 = vmatpush1.xpose.msra.mxu0 0.0
        %1554 = vmatprep.subr.mxu0 0.0
        %1555 = vmatpush1.xpose.msra.mxu0 0.0
        %1556 = vmatprep.subr.mxu0 0.0
        %1557 = vmatpush1.xpose.msra.mxu0 0.0
        %1558 = vmatprep.subr.mxu0 0.0
        %1559 = vmatpush1.xpose.msra.mxu0 0.0
        %1560 = vmatprep.subr.mxu0 0.0
        %1561 = vmatpush1.xpose.msra.mxu0 0.0
        %1562 = vmatprep.mubr.f32.mxu0 0.0
        %1563 = vmatmul.mubr.f32.gmra.mrb[0].mxu0 %v1493
        %v1564 = vpop.f32.mrb[0].mxu0
        %v1565 = vadd.f32 %v1262, %v1564
        %v1566 = vpop.f32.mrb[0].mxu0
        %1567 = vdwg.mxu0
        %v1568 = vsel %vm1263, %v1337, -inf
        %1569 = vmax.xlane.f32.xlu0 %v1568
        %v1570 = vpop.xlane.xlu0 %1569
        %v1571 = vsel %vm1263, %v1413, -inf
        %1572 = vmax.xlane.f32.xlu0 %v1571
        %v1573 = vpop.xlane.xlu0 %1572
        %v1574 = vsel %vm1263, %v1489, -inf
        %1575 = vmax.xlane.f32.xlu0 %v1574
        %v1576 = vpop.xlane.xlu0 %1575
        %v1577 = vsel %vm1263, %v1565, -inf
        %1578 = vmax.xlane.f32.xlu0 %v1577
        %v1579 = vpop.xlane.xlu0 %1578
        %v1580 = vsub.f32 %v1337, %v1570
        %v1581 = vsub.f32 %v1413, %v1573
        %v1582 = vsub.f32 %v1489, %v1576
        %v1583 = vsub.f32 %v1565, %v1579
        %v1584 = vmul.f32 %v1580, 1.442695
        %v1585 = vpow.pop %v1584
        %v1586 = vmul.f32 %v1581, 1.442695
        %v1587 = vpow.pop %v1586
        %v1588 = vmul.f32 %v1582, 1.442695
        %v1589 = vpow.pop %v1588
        %v1590 = vmul.f32 %v1583, 1.442695
        %v1591 = vpow.pop %v1590
        %v1592 = vsel %vm1263, %v1585, 0.0
        %1593 = vadd.xlane.f32.xlu0 %v1592
        %v1594 = vpop.xlane.xlu0 %1593
        %v1595 = vsel %vm1263, %v1587, 0.0
        %1596 = vadd.xlane.f32.xlu0 %v1595
        %v1597 = vpop.xlane.xlu0 %1596
        %v1598 = vsel %vm1263, %v1589, 0.0
        %1599 = vadd.xlane.f32.xlu0 %v1598
        %v1600 = vpop.xlane.xlu0 %1599
        %v1601 = vsel %vm1263, %v1591, 0.0
        %1602 = vadd.xlane.f32.xlu0 %v1601
        %v1603 = vpop.xlane.xlu0 %1602
        %v1604 = vrcp.pop %v1594
        %v1605 = vrcp.pop %v1597
        %v1606 = vrcp.pop %v1600
        %v1607 = vrcp.pop %v1603
        %v1608 = vmul.f32 %v1585, %v1604
        %v1609 = vmul.f32 %v1587, %v1605
        %v1610 = vmul.f32 %v1589, %v1606
        %v1611 = vmul.f32 %v1591, %v1607
        %v1613 = vsel %vm1263, %v1608, 0
        %1615 = vmatprep.subr.mxu0 0.0
        %1616 = vmatpush1.msra.mxu0 %v1258
        %1617 = vmatprep.subr.mxu0 0.0
        %1618 = vmatpush1.msra.mxu0 0.0
        %1619 = vmatprep.subr.mxu0 0.0
        %1620 = vmatpush1.msra.mxu0 0.0
        %1621 = vmatprep.subr.mxu0 0.0
        %1622 = vmatpush1.msra.mxu0 0.0
        %1623 = vmatprep.subr.mxu0 0.0
        %1624 = vmatpush1.msra.mxu0 0.0
        %1625 = vmatprep.subr.mxu0 0.0
        %1626 = vmatpush1.msra.mxu0 0.0
        %1627 = vmatprep.subr.mxu0 0.0
        %1628 = vmatpush1.msra.mxu0 0.0
        %1629 = vmatprep.subr.mxu0 0.0
        %1630 = vmatpush1.msra.mxu0 0.0
        %1631 = vmatprep.subr.mxu0 0.0
        %1632 = vmatpush1.msra.mxu0 0.0
        %1633 = vmatprep.subr.mxu0 0.0
        %1634 = vmatpush1.msra.mxu0 0.0
        %1635 = vmatprep.subr.mxu0 0.0
        %1636 = vmatpush1.msra.mxu0 0.0
        %1637 = vmatprep.subr.mxu0 0.0
        %1638 = vmatpush1.msra.mxu0 0.0
        %1639 = vmatprep.subr.mxu0 0.0
        %1640 = vmatpush1.msra.mxu0 0.0
        %1641 = vmatprep.subr.mxu0 0.0
        %1642 = vmatpush1.msra.mxu0 0.0
        %1643 = vmatprep.subr.mxu0 0.0
        %1644 = vmatpush1.msra.mxu0 0.0
        %1645 = vmatprep.subr.mxu0 0.0
        %1646 = vmatpush1.msra.mxu0 0.0
        %1647 = vmatprep.subr.mxu0 0.0
        %1648 = vmatpush1.msra.mxu0 0.0
        %1649 = vmatprep.subr.mxu0 0.0
        %1650 = vmatpush1.msra.mxu0 0.0
        %1651 = vmatprep.subr.mxu0 0.0
        %1652 = vmatpush1.msra.mxu0 0.0
        %1653 = vmatprep.subr.mxu0 0.0
        %1654 = vmatpush1.msra.mxu0 0.0
        %1655 = vmatprep.subr.mxu0 0.0
        %1656 = vmatpush1.msra.mxu0 0.0
        %1657 = vmatprep.subr.mxu0 0.0
        %1658 = vmatpush1.msra.mxu0 0.0
        %1659 = vmatprep.subr.mxu0 0.0
        %1660 = vmatpush1.msra.mxu0 0.0
        %1661 = vmatprep.subr.mxu0 0.0
        %1662 = vmatpush1.msra.mxu0 0.0
        %1663 = vmatprep.subr.mxu0 0.0
        %1664 = vmatpush1.msra.mxu0 0.0
        %1665 = vmatprep.subr.mxu0 0.0
        %1666 = vmatpush1.msra.mxu0 0.0
        %1667 = vmatprep.subr.mxu0 0.0
        %1668 = vmatpush1.msra.mxu0 0.0
        %1669 = vmatprep.subr.mxu0 0.0
        %1670 = vmatpush1.msra.mxu0 0.0
        %1671 = vmatprep.subr.mxu0 0.0
        %1672 = vmatpush1.msra.mxu0 0.0
        %1673 = vmatprep.subr.mxu0 0.0
        %1674 = vmatpush1.msra.mxu0 0.0
        %1675 = vmatprep.subr.mxu0 0.0
        %1676 = vmatpush1.msra.mxu0 0.0
        %1677 = vmatprep.subr.mxu0 0.0
        %1678 = vmatpush1.msra.mxu0 0.0
        %1679 = vmatprep.mubr.f32.mxu0 0.0
        %1680 = vmatmul.mubr.f32.gmra.mrb[0].mxu0 %v1613
        %v1681 = vpop.f32.mrb[0].mxu0
        %v1682 = vadd.f32 0.0, %v1681
        %v1683 = vpop.f32.mrb[0].mxu0
        %1684 = vdwg.mxu0
        %v1686 = vsel %vm1263, %v1609, 0
        %1688 = vmatprep.subr.mxu0 0.0
        %1689 = vmatpush1.msra.mxu0 %v1259
        %1690 = vmatprep.subr.mxu0 0.0
        %1691 = vmatpush1.msra.mxu0 0.0
        %1692 = vmatprep.subr.mxu0 0.0
        %1693 = vmatpush1.msra.mxu0 0.0
        %1694 = vmatprep.subr.mxu0 0.0
        %1695 = vmatpush1.msra.mxu0 0.0
        %1696 = vmatprep.subr.mxu0 0.0
        %1697 = vmatpush1.msra.mxu0 0.0
        %1698 = vmatprep.subr.mxu0 0.0
        %1699 = vmatpush1.msra.mxu0 0.0
        %1700 = vmatprep.subr.mxu0 0.0
        %1701 = vmatpush1.msra.mxu0 0.0
        %1702 = vmatprep.subr.mxu0 0.0
        %1703 = vmatpush1.msra.mxu0 0.0
        %1704 = vmatprep.subr.mxu0 0.0
        %1705 = vmatpush1.msra.mxu0 0.0
        %1706 = vmatprep.subr.mxu0 0.0
        %1707 = vmatpush1.msra.mxu0 0.0
        %1708 = vmatprep.subr.mxu0 0.0
        %1709 = vmatpush1.msra.mxu0 0.0
        %1710 = vmatprep.subr.mxu0 0.0
        %1711 = vmatpush1.msra.mxu0 0.0
        %1712 = vmatprep.subr.mxu0 0.0
        %1713 = vmatpush1.msra.mxu0 0.0
        %1714 = vmatprep.subr.mxu0 0.0
        %1715 = vmatpush1.msra.mxu0 0.0
        %1716 = vmatprep.subr.mxu0 0.0
        %1717 = vmatpush1.msra.mxu0 0.0
        %1718 = vmatprep.subr.mxu0 0.0
        %1719 = vmatpush1.msra.mxu0 0.0
        %1720 = vmatprep.subr.mxu0 0.0
        %1721 = vmatpush1.msra.mxu0 0.0
        %1722 = vmatprep.subr.mxu0 0.0
        %1723 = vmatpush1.msra.mxu0 0.0
        %1724 = vmatprep.subr.mxu0 0.0
        %1725 = vmatpush1.msra.mxu0 0.0
        %1726 = vmatprep.subr.mxu0 0.0
        %1727 = vmatpush1.msra.mxu0 0.0
        %1728 = vmatprep.subr.mxu0 0.0
        %1729 = vmatpush1.msra.mxu0 0.0
        %1730 = vmatprep.subr.mxu0 0.0
        %1731 = vmatpush1.msra.mxu0 0.0
        %1732 = vmatprep.subr.mxu0 0.0
        %1733 = vmatpush1.msra.mxu0 0.0
        %1734 = vmatprep.subr.mxu0 0.0
        %1735 = vmatpush1.msra.mxu0 0.0
        %1736 = vmatprep.subr.mxu0 0.0
        %1737 = vmatpush1.msra.mxu0 0.0
        %1738 = vmatprep.subr.mxu0 0.0
        %1739 = vmatpush1.msra.mxu0 0.0
        %1740 = vmatprep.subr.mxu0 0.0
        %1741 = vmatpush1.msra.mxu0 0.0
        %1742 = vmatprep.subr.mxu0 0.0
        %1743 = vmatpush1.msra.mxu0 0.0
        %1744 = vmatprep.subr.mxu0 0.0
        %1745 = vmatpush1.msra.mxu0 0.0
        %1746 = vmatprep.subr.mxu0 0.0
        %1747 = vmatpush1.msra.mxu0 0.0
        %1748 = vmatprep.subr.mxu0 0.0
        %1749 = vmatpush1.msra.mxu0 0.0
        %1750 = vmatprep.subr.mxu0 0.0
        %1751 = vmatpush1.msra.mxu0 0.0
        %1752 = vmatprep.mubr.f32.mxu0 0.0
        %1753 = vmatmul.mubr.f32.gmra.mrb[0].mxu0 %v1686
        %v1754 = vpop.f32.mrb[0].mxu0
        %v1755 = vadd.f32 0.0, %v1754
        %v1756 = vpop.f32.mrb[0].mxu0
        %1757 = vdwg.mxu0
        %v1759 = vsel %vm1263, %v1610, 0
        %1761 = vmatprep.subr.mxu0 0.0
        %1762 = vmatpush1.msra.mxu0 %v1260
        %1763 = vmatprep.subr.mxu0 0.0
        %1764 = vmatpush1.msra.mxu0 0.0
        %1765 = vmatprep.subr.mxu0 0.0
        %1766 = vmatpush1.msra.mxu0 0.0
        %1767 = vmatprep.subr.mxu0 0.0
        %1768 = vmatpush1.msra.mxu0 0.0
        %1769 = vmatprep.subr.mxu0 0.0
        %1770 = vmatpush1.msra.mxu0 0.0
        %1771 = vmatprep.subr.mxu0 0.0
        %1772 = vmatpush1.msra.mxu0 0.0
        %1773 = vmatprep.subr.mxu0 0.0
        %1774 = vmatpush1.msra.mxu0 0.0
        %1775 = vmatprep.subr.mxu0 0.0
        %1776 = vmatpush1.msra.mxu0 0.0
        %1777 = vmatprep.subr.mxu0 0.0
        %1778 = vmatpush1.msra.mxu0 0.0
        %1779 = vmatprep.subr.mxu0 0.0
        %1780 = vmatpush1.msra.mxu0 0.0
        %1781 = vmatprep.subr.mxu0 0.0
        %1782 = vmatpush1.msra.mxu0 0.0
        %1783 = vmatprep.subr.mxu0 0.0
        %1784 = vmatpush1.msra.mxu0 0.0
        %1785 = vmatprep.subr.mxu0 0.0
        %1786 = vmatpush1.msra.mxu0 0.0
        %1787 = vmatprep.subr.mxu0 0.0
        %1788 = vmatpush1.msra.mxu0 0.0
        %1789 = vmatprep.subr.mxu0 0.0
        %1790 = vmatpush1.msra.mxu0 0.0
        %1791 = vmatprep.subr.mxu0 0.0
        %1792 = vmatpush1.msra.mxu0 0.0
        %1793 = vmatprep.subr.mxu0 0.0
        %1794 = vmatpush1.msra.mxu0 0.0
        %1795 = vmatprep.subr.mxu0 0.0
        %1796 = vmatpush1.msra.mxu0 0.0
        %1797 = vmatprep.subr.mxu0 0.0
        %1798 = vmatpush1.msra.mxu0 0.0
        %1799 = vmatprep.subr.mxu0 0.0
        %1800 = vmatpush1.msra.mxu0 0.0
        %1801 = vmatprep.subr.mxu0 0.0
        %1802 = vmatpush1.msra.mxu0 0.0
        %1803 = vmatprep.subr.mxu0 0.0
        %1804 = vmatpush1.msra.mxu0 0.0
        %1805 = vmatprep.subr.mxu0 0.0
        %1806 = vmatpush1.msra.mxu0 0.0
        %1807 = vmatprep.subr.mxu0 0.0
        %1808 = vmatpush1.msra.mxu0 0.0
        %1809 = vmatprep.subr.mxu0 0.0
        %1810 = vmatpush1.msra.mxu0 0.0
        %1811 = vmatprep.subr.mxu0 0.0
        %1812 = vmatpush1.msra.mxu0 0.0
        %1813 = vmatprep.subr.mxu0 0.0
        %1814 = vmatpush1.msra.mxu0 0.0
        %1815 = vmatprep.subr.mxu0 0.0
        %1816 = vmatpush1.msra.mxu0 0.0
        %1817 = vmatprep.subr.mxu0 0.0
        %1818 = vmatpush1.msra.mxu0 0.0
        %1819 = vmatprep.subr.mxu0 0.0
        %1820 = vmatpush1.msra.mxu0 0.0
        %1821 = vmatprep.subr.mxu0 0.0
        %1822 = vmatpush1.msra.mxu0 0.0
        %1823 = vmatprep.subr.mxu0 0.0
        %1824 = vmatpush1.msra.mxu0 0.0
        %1825 = vmatprep.mubr.f32.mxu0 0.0
        %1826 = vmatmul.mubr.f32.gmra.mrb[0].mxu0 %v1759
        %v1827 = vpop.f32.mrb[0].mxu0
        %v1828 = vadd.f32 0.0, %v1827
        %v1829 = vpop.f32.mrb[0].mxu0
        %1830 = vdwg.mxu0
        %v1832 = vsel %vm1263, %v1611, 0
        %1834 = vmatprep.subr.mxu0 0.0
        %1835 = vmatpush1.msra.mxu0 %v1261
        %1836 = vmatprep.subr.mxu0 0.0
        %1837 = vmatpush1.msra.mxu0 0.0
        %1838 = vmatprep.subr.mxu0 0.0
        %1839 = vmatpush1.msra.mxu0 0.0
        %1840 = vmatprep.subr.mxu0 0.0
        %1841 = vmatpush1.msra.mxu0 0.0
        %1842 = vmatprep.subr.mxu0 0.0
        %1843 = vmatpush1.msra.mxu0 0.0
        %1844 = vmatprep.subr.mxu0 0.0
        %1845 = vmatpush1.msra.mxu0 0.0
        %1846 = vmatprep.subr.mxu0 0.0
        %1847 = vmatpush1.msra.mxu0 0.0
        %1848 = vmatprep.subr.mxu0 0.0
        %1849 = vmatpush1.msra.mxu0 0.0
        %1850 = vmatprep.subr.mxu0 0.0
        %1851 = vmatpush1.msra.mxu0 0.0
        %1852 = vmatprep.subr.mxu0 0.0
        %1853 = vmatpush1.msra.mxu0 0.0
        %1854 = vmatprep.subr.mxu0 0.0
        %1855 = vmatpush1.msra.mxu0 0.0
        %1856 = vmatprep.subr.mxu0 0.0
        %1857 = vmatpush1.msra.mxu0 0.0
        %1858 = vmatprep.subr.mxu0 0.0
        %1859 = vmatpush1.msra.mxu0 0.0
        %1860 = vmatprep.subr.mxu0 0.0
        %1861 = vmatpush1.msra.mxu0 0.0
        %1862 = vmatprep.subr.mxu0 0.0
        %1863 = vmatpush1.msra.mxu0 0.0
        %1864 = vmatprep.subr.mxu0 0.0
        %1865 = vmatpush1.msra.mxu0 0.0
        %1866 = vmatprep.subr.mxu0 0.0
        %1867 = vmatpush1.msra.mxu0 0.0
        %1868 = vmatprep.subr.mxu0 0.0
        %1869 = vmatpush1.msra.mxu0 0.0
        %1870 = vmatprep.subr.mxu0 0.0
        %1871 = vmatpush1.msra.mxu0 0.0
        %1872 = vmatprep.subr.mxu0 0.0
        %1873 = vmatpush1.msra.mxu0 0.0
        %1874 = vmatprep.subr.mxu0 0.0
        %1875 = vmatpush1.msra.mxu0 0.0
        %1876 = vmatprep.subr.mxu0 0.0
        %1877 = vmatpush1.msra.mxu0 0.0
        %1878 = vmatprep.subr.mxu0 0.0
        %1879 = vmatpush1.msra.mxu0 0.0
        %1880 = vmatprep.subr.mxu0 0.0
        %1881 = vmatpush1.msra.mxu0 0.0
        %1882 = vmatprep.subr.mxu0 0.0
        %1883 = vmatpush1.msra.mxu0 0.0
        %1884 = vmatprep.subr.mxu0 0.0
        %1885 = vmatpush1.msra.mxu0 0.0
        %1886 = vmatprep.subr.mxu0 0.0
        %1887 = vmatpush1.msra.mxu0 0.0
        %1888 = vmatprep.subr.mxu0 0.0
        %1889 = vmatpush1.msra.mxu0 0.0
        %1890 = vmatprep.subr.mxu0 0.0
        %1891 = vmatpush1.msra.mxu0 0.0
        %1892 = vmatprep.subr.mxu0 0.0
        %1893 = vmatpush1.msra.mxu0 0.0
        %1894 = vmatprep.subr.mxu0 0.0
        %1895 = vmatpush1.msra.mxu0 0.0
        %1896 = vmatprep.subr.mxu0 0.0
        %1897 = vmatpush1.msra.mxu0 0.0
        %1898 = vmatprep.mubr.f32.mxu0 0.0
        %1899 = vmatmul.mubr.f32.gmra.mrb[0].mxu0 %v1832
        %v1900 = vpop.f32.mrb[0].mxu0
        %v1901 = vadd.f32 0.0, %v1900
        %v1902 = vpop.f32.mrb[0].mxu0
        %1903 = vdwg.mxu0
        %v1904 = vcombine.low %v1682, %v1828
        %v1905 = vcombine.high %v1682, %v1828
        %v1907 = vunpack.c.l.s4 1983009808
        %v1908 = vunpack.c.0.s8 %v1907
        %v1909 = vlaneseq
        %v1910 = vshrl.u32 %v1909, 7
        %v1911 = vsub.s32 %v1908, %v1910
        %v1912 = vrot.slane %v1904, %v1911
        %v1914 = vunpack.c.l.s4 1983009808
        %v1915 = vunpack.c.0.s8 %v1914
        %v1916 = vlaneseq
        %v1917 = vshrl.u32 %v1916, 7
        %v1918 = vsub.s32 %v1915, %v1917
        %v1919 = vrot.slane %v1905, %v1918
        %v1920 = vcombine.low %v1755, %v1901
        %v1921 = vcombine.high %v1755, %v1901
        %v1923 = vunpack.c.l.s4 1983009808
        %v1924 = vunpack.c.0.s8 %v1923
        %v1925 = vlaneseq
        %v1926 = vshrl.u32 %v1925, 7
        %v1927 = vsub.s32 %v1924, %v1926
        %v1928 = vrot.slane %v1920, %v1927
        %v1930 = vunpack.c.l.s4 1983009808
        %v1931 = vunpack.c.0.s8 %v1930
        %v1932 = vlaneseq
        %v1933 = vshrl.u32 %v1932, 7
        %v1934 = vsub.s32 %v1931, %v1933
        %v1935 = vrot.slane %v1921, %v1934
        %v1936 = vcombine.low %v1912, %v1928
        %v1937 = vcombine.high %v1912, %v1928
        %v1939 = vunpack.c.l.s4 1934713408
        %v1940 = vunpack.c.0.s8 %v1939
        %v1941 = vlaneseq
        %v1942 = vshrl.u32 %v1941, 7
        %v1943 = vsub.s32 %v1940, %v1942
        %v1944 = vrot.slane %v1936, %v1943
        %v1946 = vunpack.c.l.s4 1934713408
        %v1947 = vunpack.c.0.s8 %v1946
        %v1948 = vlaneseq
        %v1949 = vshrl.u32 %v1948, 7
        %v1950 = vsub.s32 %v1947, %v1949
        %v1951 = vrot.slane %v1937, %v1950
        %v1952 = vcombine.low %v1919, %v1935
        %v1953 = vcombine.high %v1919, %v1935
        %v1955 = vunpack.c.l.s4 1934713408
        %v1956 = vunpack.c.0.s8 %v1955
        %v1957 = vlaneseq
        %v1958 = vshrl.u32 %v1957, 7
        %v1959 = vsub.s32 %v1956, %v1958
        %v1960 = vrot.slane %v1952, %v1959
        %v1962 = vunpack.c.l.s4 1934713408
        %v1963 = vunpack.c.0.s8 %v1962
        %v1964 = vlaneseq
        %v1965 = vshrl.u32 %v1964, 7
        %v1966 = vsub.s32 %v1963, %v1965
        %v1967 = vrot.slane %v1953, %v1966
        %v1968 = vcombine.high %v1944, 0.0
        %v1969 = vcombine.high %v1951, 0.0
        %v1970 = vcombine.high %v1960, 0.0
        %v1971 = vcombine.high %v1967, 0.0
        %v1972 = vcombine.low %v1944, %v1951
        %v1974 = vunpack.c.l.s4 1983009808
        %v1975 = vunpack.c.0.s8 %v1974
        %v1976 = vlaneseq
        %v1977 = vshrl.u32 %v1976, 7
        %v1978 = vsub.s32 %v1975, %v1977
        %v1979 = vrot.slane %v1972, %v1978
        %v1980 = vcombine.low %v1968, %v1969
        %v1982 = vunpack.c.l.s4 1983009808
        %v1983 = vunpack.c.0.s8 %v1982
        %v1984 = vlaneseq
        %v1985 = vshrl.u32 %v1984, 7
        %v1986 = vsub.s32 %v1983, %v1985
        %v1987 = vrot.slane %v1980, %v1986
        %v1988 = vcombine.low %v1960, %v1967
        %v1990 = vunpack.c.l.s4 1983009808
        %v1991 = vunpack.c.0.s8 %v1990
        %v1992 = vlaneseq
        %v1993 = vshrl.u32 %v1992, 7
        %v1994 = vsub.s32 %v1991, %v1993
        %v1995 = vrot.slane %v1988, %v1994
        %v1996 = vcombine.low %v1970, %v1971
        %v1998 = vunpack.c.l.s4 1983009808
        %v1999 = vunpack.c.0.s8 %v1998
        %v2000 = vlaneseq
        %v2001 = vshrl.u32 %v2000, 7
        %v2002 = vsub.s32 %v1999, %v2001
        %v2003 = vrot.slane %v1996, %v2002
        %v2004 = vcombine.low %v1979, %v1987
        %v2005 = vcombine.high %v1979, %v1987
        %v2007 = vunpack.c.l.s4 1934713408
        %v2008 = vunpack.c.0.s8 %v2007
        %v2009 = vlaneseq
        %v2010 = vshrl.u32 %v2009, 7
        %v2011 = vsub.s32 %v2008, %v2010
        %v2012 = vrot.slane %v2004, %v2011
        %v2014 = vunpack.c.l.s4 1934713408
        %v2015 = vunpack.c.0.s8 %v2014
        %v2016 = vlaneseq
        %v2017 = vshrl.u32 %v2016, 7
        %v2018 = vsub.s32 %v2015, %v2017
        %v2019 = vrot.slane %v2005, %v2018
        %v2020 = vcombine.low %v1995, %v2003
        %v2021 = vcombine.high %v1995, %v2003
        %v2023 = vunpack.c.l.s4 1934713408
        %v2024 = vunpack.c.0.s8 %v2023
        %v2025 = vlaneseq
        %v2026 = vshrl.u32 %v2025, 7
        %v2027 = vsub.s32 %v2024, %v2026
        %v2028 = vrot.slane %v2020, %v2027
        %v2030 = vunpack.c.l.s4 1934713408
        %v2031 = vunpack.c.0.s8 %v2030
        %v2032 = vlaneseq
        %v2033 = vshrl.u32 %v2032, 7
        %v2034 = vsub.s32 %v2031, %v2033
        %v2035 = vrot.slane %v2021, %v2034
        %v2036 = vcombine.low %v2012, %v2028
        %v2037 = vcombine.high %v2012, %v2028
        %v2038 = vcombine.low %v2019, %v2035
        %v2039 = vcombine.high %v2019, %v2035
        %2041 = vrot.lane.b32.xlu0 %v2037, 8
        %v2042 = vpop.permute.xlu0 %2041
        %2045 = vrot.lane.b32.xlu0 %v2038, 16
        %v2046 = vpop.permute.xlu0 %2045
        %2049 = vrot.lane.b32.xlu0 %v2039, 24
        %v2050 = vpop.permute.xlu0 %2049
        %v2052 = vsel %vm1263, %v2036, %v2042
        %vm2053 = vcmask 130048
        %v2054 = vsel %vm2053, %v2052, %v2046
        %vm2055 = vcmask 195584
        %v2056 = vsel %vm2055, %v2054, %v2050
        %v2057 = vpack.c.bf16 %v2056, %v2056
        %v2058 = vld [vmem:[%s685] sm:$0xf]
        %v2059 = vld [vmem:[%s685 + $0x4] sm:$0xf]
        %v2060 = vld [vmem:[%s685 + $0x8] sm:$0xf]
        %v2061 = vld [vmem:[%s685 + $0xc] sm:$0xf]
        %v2062 = vld [vmem:[%s688] sm:$0x1]
        %v2064 = vlaneseq
        %v2065 = vshrl.u32 %v2064, 7
        %v2066 = vsub.s32 0, %v2065
        %v2067 = vrot.slane %v2062, %v2066
        %v2073 = vunpack.c.l.b16 %v2058
        %v2074 = vunpack.c.l.b16 %v2059
        %v2075 = vunpack.c.l.b16 %v2060
        %v2076 = vunpack.c.l.b16 %v2061
        %v2077 = vpack.c.b16 %v2074, %v2073
        %v2078 = vpack.c.b16 %v2076, %v2075
        %v2082 = vsel %vm724, %v2057, 0
        %2084 = vmatprep.subr.bf16.mxu0 0
        %2085 = vmatpush1.bf16.msra.mxu0 %v2077
        %2086 = vmatprep.subr.bf16.mxu0 0
        %2087 = vmatpush1.bf16.msra.mxu0 %v2078
        %2088 = vmatprep.subr.bf16.mxu0 0
        %2089 = vmatpush1.bf16.msra.mxu0 0
        %2090 = vmatprep.subr.bf16.mxu0 0
        %2091 = vmatpush1.bf16.msra.mxu0 0
        %2092 = vmatprep.subr.bf16.mxu0 0
        %2093 = vmatpush1.bf16.msra.mxu0 0
        %2094 = vmatprep.subr.bf16.mxu0 0
        %2095 = vmatpush1.bf16.msra.mxu0 0
        %2096 = vmatprep.subr.bf16.mxu0 0
        %2097 = vmatpush1.bf16.msra.mxu0 0
        %2098 = vmatprep.subr.bf16.mxu0 0
        %2099 = vmatpush1.bf16.msra.mxu0 0
        %2100 = vmatprep.subr.bf16.mxu0 0
        %2101 = vmatpush1.bf16.msra.mxu0 0
        %2102 = vmatprep.subr.bf16.mxu0 0
        %2103 = vmatpush1.bf16.msra.mxu0 0
        %2104 = vmatprep.subr.bf16.mxu0 0
        %2105 = vmatpush1.bf16.msra.mxu0 0
        %2106 = vmatprep.subr.bf16.mxu0 0
        %2107 = vmatpush1.bf16.msra.mxu0 0
        %2108 = vmatprep.subr.bf16.mxu0 0
        %2109 = vmatpush1.bf16.msra.mxu0 0
        %2110 = vmatprep.subr.bf16.mxu0 0
        %2111 = vmatpush1.bf16.msra.mxu0 0
        %2112 = vmatprep.subr.bf16.mxu0 0
        %2113 = vmatpush1.bf16.msra.mxu0 0
        %2114 = vmatprep.subr.bf16.mxu0 0
        %2115 = vmatpush1.bf16.msra.mxu0 0
        %2116 = vmatprep.mubr.bf16.mxu0 0
        %2117 = vmatmul.mubr.bf16.gmra.mrb[0].mxu0 %v2082
        %v2118 = vpop.f32.mrb[0].mxu0
        %v2119 = vadd.f32 %v2067, %v2118
        %v2120 = vpop.f32.mrb[0].mxu0
        %v2121 = vpop.f32.mrb[0].mxu0
        %v2122 = vpop.f32.mrb[0].mxu0
        %2123 = vdwg.mxu0
        %v2124 = vadd.f32 %v752, %v2119
        %v2125 = vld [vmem:[%s691] sm:$0x1]
        %v2126 = vld [vmem:[%s694] sm:$0x1]
        %v2127 = vsel %vm724, %v2124, 0.0
        %2128 = vadd.xlane.f32.xlu0 %v2127
        %v2129 = vpop.xlane.xlu0 %2128
        %v2130 = vmul.f32 %v2129, %v728
        %v2131 = vsub.f32 %v2124, %v2130
        %v2132 = vmul.f32 %v2131, %v2131
        %v2133 = vsel %vm724, %v2132, 0.0
        %2134 = vadd.xlane.f32.xlu0 %v2133
        %v2135 = vpop.xlane.xlu0 %2134
        %v2136 = vmul.f32 %v2135, %v728
        %v2137 = vadd.f32 %v2136, 1e-05
        %v2138 = vrsqrt.pop %v2137
        %v2139 = vmul.f32 %v2131, %v2138
        %v2141 = vlaneseq
        %v2142 = vshrl.u32 %v2141, 7
        %v2143 = vsub.s32 0, %v2142
        %v2144 = vrot.slane %v2125, %v2143
        %v2146 = vmul.f32 %v2139, %v2144
        %v2148 = vlaneseq
        %v2149 = vshrl.u32 %v2148, 7
        %v2150 = vsub.s32 0, %v2149
        %v2151 = vrot.slane %v2126, %v2150
        %v2153 = vadd.f32 %v2146, %v2151
        %v2154 = vpack.c.bf16 %v2153, %v2153
        %v2155 = vld [vmem:[%s699] sm:$0xf]
        %v2156 = vld [vmem:[%s699 + $0x4] sm:$0xf]
        %v2157 = vld [vmem:[%s699 + $0x8] sm:$0xf]
        %v2158 = vld [vmem:[%s699 + $0xc] sm:$0xf]
        %v2159 = vld [vmem:[%s702] sm:$0x1]
        %v2161 = vlaneseq
        %v2162 = vshrl.u32 %v2161, 7
        %v2163 = vsub.s32 0, %v2162
        %v2164 = vrot.slane %v2159, %v2163
        %v2170 = vunpack.c.l.b16 %v2155
        %v2171 = vunpack.c.l.b16 %v2156
        %v2172 = vunpack.c.l.b16 %v2157
        %v2173 = vunpack.c.l.b16 %v2158
        %v2174 = vpack.c.b16 %v2171, %v2170
        %v2175 = vpack.c.b16 %v2173, %v2172
        %v2179 = vsel %vm724, %v2154, 0
        %2181 = vmatprep.subr.bf16.mxu0 0
        %2182 = vmatpush1.bf16.msra.mxu0 %v2174
        %2183 = vmatprep.subr.bf16.mxu0 0
        %2184 = vmatpush1.bf16.msra.mxu0 %v2175
        %2185 = vmatprep.subr.bf16.mxu0 0
        %2186 = vmatpush1.bf16.msra.mxu0 0
        %2187 = vmatprep.subr.bf16.mxu0 0
        %2188 = vmatpush1.bf16.msra.mxu0 0
        %2189 = vmatprep.subr.bf16.mxu0 0
        %2190 = vmatpush1.bf16.msra.mxu0 0
        %2191 = vmatprep.subr.bf16.mxu0 0
        %2192 = vmatpush1.bf16.msra.mxu0 0
        %2193 = vmatprep.subr.bf16.mxu0 0
        %2194 = vmatpush1.bf16.msra.mxu0 0
        %2195 = vmatprep.subr.bf16.mxu0 0
        %2196 = vmatpush1.bf16.msra.mxu0 0
        %2197 = vmatprep.subr.bf16.mxu0 0
        %2198 = vmatpush1.bf16.msra.mxu0 0
        %2199 = vmatprep.subr.bf16.mxu0 0
        %2200 = vmatpush1.bf16.msra.mxu0 0
        %2201 = vmatprep.subr.bf16.mxu0 0
        %2202 = vmatpush1.bf16.msra.mxu0 0
        %2203 = vmatprep.subr.bf16.mxu0 0
        %2204 = vmatpush1.bf16.msra.mxu0 0
        %2205 = vmatprep.subr.bf16.mxu0 0
        %2206 = vmatpush1.bf16.msra.mxu0 0
        %2207 = vmatprep.subr.bf16.mxu0 0
        %2208 = vmatpush1.bf16.msra.mxu0 0
        %2209 = vmatprep.subr.bf16.mxu0 0
        %2210 = vmatpush1.bf16.msra.mxu0 0
        %2211 = vmatprep.subr.bf16.mxu0 0
        %2212 = vmatpush1.bf16.msra.mxu0 0
        %2213 = vmatprep.mubr.bf16.mxu0 0
        %2214 = vmatmul.mubr.bf16.gmra.mrb[0].mxu0 %v2179
        %v2215 = vpop.f32.mrb[0].mxu0
        %v2216 = vadd.f32 %v2164, %v2215
        %v2217 = vpop.f32.mrb[0].mxu0
        %v2218 = vpop.f32.mrb[0].mxu0
        %v2219 = vpop.f32.mrb[0].mxu0
        %2220 = vdwg.mxu0
        %v2221 = vmax.f32 %v2216, 0.0
        %v2222 = vpack.c.bf16 %v2221, %v2221
        %v2223 = vld [vmem:[%s707] sm:$0xf]
        %v2224 = vld [vmem:[%s707 + $0x4] sm:$0xf]
        %v2225 = vld [vmem:[%s707 + $0x8] sm:$0xf]
        %v2226 = vld [vmem:[%s707 + $0xc] sm:$0xf]
        %v2227 = vld [vmem:[%s707 + $0x10] sm:$0xf]
        %v2228 = vld [vmem:[%s707 + $0x14] sm:$0xf]
        %v2229 = vld [vmem:[%s707 + $0x18] sm:$0xf]
        %v2230 = vld [vmem:[%s707 + $0x1c] sm:$0xf]
        %v2231 = vld [vmem:[%s707 + $0x20] sm:$0xf]
        %v2232 = vld [vmem:[%s707 + $0x24] sm:$0xf]
        %v2233 = vld [vmem:[%s707 + $0x28] sm:$0xf]
        %v2234 = vld [vmem:[%s707 + $0x2c] sm:$0xf]
        %v2235 = vld [vmem:[%s707 + $0x30] sm:$0xf]
        %v2236 = vld [vmem:[%s707 + $0x34] sm:$0xf]
        %v2237 = vld [vmem:[%s707 + $0x38] sm:$0xf]
        %v2238 = vld [vmem:[%s707 + $0x3c] sm:$0xf]
        %v2239 = vld [vmem:[%s710] sm:$0x1]
        %v2241 = vlaneseq
        %v2242 = vshrl.u32 %v2241, 7
        %v2243 = vsub.s32 0, %v2242
        %v2244 = vrot.slane %v2239, %v2243
        %v2262 = vunpack.c.l.b16 %v2223
        %v2263 = vunpack.c.l.b16 %v2224
        %v2264 = vunpack.c.l.b16 %v2225
        %v2265 = vunpack.c.l.b16 %v2226
        %v2266 = vunpack.c.l.b16 %v2227
        %v2267 = vunpack.c.l.b16 %v2228
        %v2268 = vunpack.c.l.b16 %v2229
        %v2269 = vunpack.c.l.b16 %v2230
        %v2270 = vunpack.c.l.b16 %v2231
        %v2271 = vunpack.c.l.b16 %v2232
        %v2272 = vunpack.c.l.b16 %v2233
        %v2273 = vunpack.c.l.b16 %v2234
        %v2274 = vunpack.c.l.b16 %v2235
        %v2275 = vunpack.c.l.b16 %v2236
        %v2276 = vunpack.c.l.b16 %v2237
        %v2277 = vunpack.c.l.b16 %v2238
        %v2278 = vpack.c.b16 %v2263, %v2262
        %v2279 = vpack.c.b16 %v2265, %v2264
        %v2280 = vpack.c.b16 %v2267, %v2266
        %v2281 = vpack.c.b16 %v2269, %v2268
        %v2282 = vpack.c.b16 %v2271, %v2270
        %v2283 = vpack.c.b16 %v2273, %v2272
        %v2284 = vpack.c.b16 %v2275, %v2274
        %v2285 = vpack.c.b16 %v2277, %v2276
        %2294 = vmatprep.subr.bf16.mxu0 0
        %2295 = vmatpush1.bf16.msra.mxu0 %v2278
        %2296 = vmatprep.subr.bf16.mxu0 0
        %2297 = vmatpush1.bf16.msra.mxu0 %v2279
        %2298 = vmatprep.subr.bf16.mxu0 0
        %2299 = vmatpush1.bf16.msra.mxu0 %v2280
        %2300 = vmatprep.subr.bf16.mxu0 0
        %2301 = vmatpush1.bf16.msra.mxu0 %v2281
        %2302 = vmatprep.subr.bf16.mxu0 0
        %2303 = vmatpush1.bf16.msra.mxu0 %v2282
        %2304 = vmatprep.subr.bf16.mxu0 0
        %2305 = vmatpush1.bf16.msra.mxu0 %v2283
        %2306 = vmatprep.subr.bf16.mxu0 0
        %2307 = vmatpush1.bf16.msra.mxu0 %v2284
        %2308 = vmatprep.subr.bf16.mxu0 0
        %2309 = vmatpush1.bf16.msra.mxu0 %v2285
        %2310 = vmatprep.subr.bf16.mxu0 0
        %2311 = vmatpush1.bf16.msra.mxu0 0
        %2312 = vmatprep.subr.bf16.mxu0 0
        %2313 = vmatpush1.bf16.msra.mxu0 0
        %2314 = vmatprep.subr.bf16.mxu0 0
        %2315 = vmatpush1.bf16.msra.mxu0 0
        %2316 = vmatprep.subr.bf16.mxu0 0
        %2317 = vmatpush1.bf16.msra.mxu0 0
        %2318 = vmatprep.subr.bf16.mxu0 0
        %2319 = vmatpush1.bf16.msra.mxu0 0
        %2320 = vmatprep.subr.bf16.mxu0 0
        %2321 = vmatpush1.bf16.msra.mxu0 0
        %2322 = vmatprep.subr.bf16.mxu0 0
        %2323 = vmatpush1.bf16.msra.mxu0 0
        %2324 = vmatprep.subr.bf16.mxu0 0
        %2325 = vmatpush1.bf16.msra.mxu0 0
        %2326 = vmatprep.mubr.bf16.mxu0 0
        %2327 = vmatmul.mubr.bf16.gmra.mrb[0].mxu0 %v2222
        %v2328 = vpop.f32.mrb[0].mxu0
        %v2329 = vadd.f32 %v2244, %v2328
        %v2330 = vpop.f32.mrb[0].mxu0
        %v2331 = vpop.f32.mrb[0].mxu0
        %v2332 = vpop.f32.mrb[0].mxu0
        %2333 = vdwg.mxu0
        %v2334 = vadd.f32 %v2153, %v2329
        %2335 = vst.msk [vmem:[#allocation2] sm:$0xff] %vm724, %v2334
        %p2336 = scmp.eq.s32.totalorder %s34, 1
        // Predicated region
        $region85: #{tpu_custom_call.1} parent=79 // pred_check
          %p2337 = pneg %p2336
        $region86: #{tpu_custom_call.1} parent=79 // pred_check_branch
          %2339 = sbr.rel (%p2337) target = $region88
        $region87: #{tpu_custom_call.1} parent=79 // pred_region
          %2340 = vst.msk [vmem:[%s658] sm:$0xff] %vm724, %v2334
        $region88: #{tpu_custom_call.1} parent=79 // pred_fallthru
          _
        %s2341 = sand.u32 %s434, 1
        %s2342 = scalar_lea.sflag [#allocation4], %s2341
        %s2343 = sand.u32 %s434, 1
        %s2344 = smul.addr %s2343, 8
        %s2345 = scalar_lea.vmem [#allocation3], %s2344
        // Predicated region
        $region89: #{tpu_custom_call.1} parent=79 // pred_check
          %p2346 = pneg %p444
        $region90: #{tpu_custom_call.1} parent=79 // pred_check_branch
          %2348 = sbr.rel (%p2346) target = $region92
        $region91: #{tpu_custom_call.1} parent=79 // pred_region
          %s2350 = ssub.s32 128, 128
          %2351 = vsyncadd %s2342, %s2350
          %s2352 = smul.addr %s33, 128
          %s2353 = scalar_lea.hbm %s15, %s2352
          %s2355 = sshll.u32 %s2345, 4
          %s2356 = int_to_ptr.vmem [resolvable:$true] %s2355
          %2358 = dma.vmem_to_hbm [thread:$0]  %s2356, 128, %s2353, %s2342
        $region92: #{tpu_custom_call.1} parent=79 // pred_fallthru
          _
      $region80: #{tpu_custom_call.1} parent=5 // pred_fallthru
        _
      %p2359 = scmp.le.s32.totalorder 2, %s24
      // Predicated region
      $region93: #{tpu_custom_call.1} parent=5 // pred_check
        %p2360 = pneg %p2359
      $region94: #{tpu_custom_call.1} parent=5 // pred_check_branch
        %2362 = sbr.rel (%p2360) target = $region96
      $region95: #{tpu_custom_call.1} parent=5 // pred_region
        %s2363 = ssub.s32 %s24, 2
        // Predicated region
        $region97: #{tpu_custom_call.1} parent=95 // pred_check
          %p2364 = pneg %p450
        $region98: #{tpu_custom_call.1} parent=95 // pred_check_branch
          %2366 = sbr.rel (%p2364) target = $region100
        $region99: #{tpu_custom_call.1} parent=95 // pred_region
          %s2367 = sand.u32 %s435, 1
          %s2368 = scalar_lea.sflag [#allocation4], %s2367
          %s2369 = sand.u32 %s435, 1
          %s2370 = smul.addr %s2369, 8
          %s2371 = scalar_lea.vmem [#allocation3], %s2370
          %2372 = dma.done %s2368, 128
        $region100: #{tpu_custom_call.1} parent=95 // pred_fallthru
          _
      $region96: #{tpu_custom_call.1} parent=5 // pred_fallthru
        _
    $region6: #{tpu_custom_call.1} parent=1 // loop_footer
      %s28 = sadd.s32 1, %s24
    $region7: #{tpu_custom_call.1} parent=1 // loop_footer_branch
      %23 = sbr.rel target = $region3
    $region8: #{tpu_custom_call.1} parent=1 // loop_exit
      _
    %2373 = vsyncpa [#allocation4], 1
    %s2374 = scalar_lea.sflag [#allocation4], 1
    %2375 = vsyncpa %s2374, 1

</llo_original>
